<compile_context>
chip_gen: v5e
topology: v5e:2x2
jax: 0.10.0
libtpu: 0.0.40
codegen_flags: <defaults>
</compile_context>

<pallas_src>
import functools

import jax
import jax.numpy as jnp
from jax import lax
from jax.experimental import pallas as pl
from jax.experimental.pallas import tpu as pltpu

_CBA_EPS = 1e-5     # nn.BatchNorm2d default inside ConvBnAct
_OUTER_EPS = 1e-3   # ReversedCSP(eps=0.001) outer BN


# --------------------------------------------------------------------------
# Mish
# --------------------------------------------------------------------------
def _mish_ref(x):
    # Exact, numerically stable reference: x * tanh(softplus(x)).
    sp = jnp.maximum(x, 0.0) + jnp.log(1.0 + jnp.exp(-jnp.abs(x)))
    return x * jnp.tanh(sp)


def _mish_fast(x):
    # In-kernel Mish: x * tanh(log(1+e^x)) == x * (t^2+2t)/(t^2+2t+2), t=e^x.
    # Clamp x so t^2 stays finite; for x>20 the ratio is 1 to f32 precision.
    # 1 exp + 1 approx reciprocal on the EUP vs exp+log+tanh in the naive form.
    t = jnp.exp(jnp.minimum(x, 20.0))
    num = t * (t + 2.0)
    return x * num * pl.reciprocal(num + 2.0, approx=True)


# --------------------------------------------------------------------------
# Pallas kernel
# --------------------------------------------------------------------------
def _rcsp_kernel(x_ref, masks_ref, w_in_ref, b_in_ref, w1_ref, b1_ref,
                 w3_ref, b3_ref, w_byp_ref, b_byp_ref, a_bn1_ref, b_bn1_ref,
                 w_out1_ref, w_out2_ref, b_out_ref, o_ref,
                 *, img_w, lane, depth):
    f32 = jnp.float32
    bf16 = jnp.bfloat16

    def mm(w, a):
        # bf16 x bf16 MXU matmul, f32 accumulation.
        return jnp.dot(w, a.astype(bf16), preferred_element_type=f32)

    x_in = x_ref[...]                                  # (C_in_pad, LANE)
    masks = masks_ref[...].astype(f32)                 # (9, LANE) constants

    # ---- in_conv: 1x1 conv + folded BN + Mish -> x0 ----
    x0 = _mish_fast(mm(w_in_ref[...], x_in) + b_in_ref[...])     # (C, LANE)

    # ---- main path: depth x [1x1 ConvBnAct -> 3x3 ConvBnAct] ----
    h = x0
    for d in range(depth):
        h = _mish_fast(mm(w1_ref[d], h) + b1_ref[d])             # (C, LANE)

        # im2col: stack the centre map + 8 rolled & boundary-masked taps
        # along the channel axis -> (9C, LANE), then ONE deep-K matmul.
        taps = []
        for t in range(9):
            dh, dw = t // 3 - 1, t % 3 - 1
            delta = dh * img_w + dw
            if delta == 0:
                taps.append(h)
            else:
                rolled = pltpu.roll(h, (-delta) % lane, 1)       # XLU lane roll
                taps.append(rolled * masks[t:t + 1, :])          # zero the halo
        stacked = jnp.concatenate(taps, axis=0)                  # (9C, LANE)
        h = _mish_fast(mm(w3_ref[d], stacked) + b3_ref[d])
    h1 = h

    # ---- bypass path + outer BN + Mish (channel concat folded away) ----
    h1b = _mish_fast(a_bn1_ref[...] * h1 + b_bn1_ref[...])
    h2b = _mish_fast(mm(w_byp_ref[...], x0) + b_byp_ref[...])

    # ---- out_conv on the virtual concatenation ----
    out = _mish_fast(mm(w_out1_ref[...], h1b)
                     + mm(w_out2_ref[...], h2b)
                     + b_out_ref[...])
    o_ref[...] = out.astype(o_ref.dtype)


# --------------------------------------------------------------------------
# Host-side wrapper
# --------------------------------------------------------------------------
def _make_tap_masks(H, W, p_pad, b_step):
    """(9, b_step*p_pad) f32 per-tap validity masks (centre row unused)."""
    P = H * W
    p = jnp.arange(p_pad)
    h = p // W
    w = p % W
    inside = p < P
    rows = []
    for kh in range(3):
        for kw in range(3):
            dh, dw = kh - 1, kw - 1
            if dh == 0 and dw == 0:
                rows.append(jnp.ones((p_pad,), jnp.float32))
            else:
                valid = (inside & (h + dh >= 0) & (h + dh < H)
                         & (w + dw >= 0) & (w + dw < W))
                rows.append(valid.astype(jnp.float32))
    masks = jnp.stack(rows, 0)                    # (9, p_pad)
    return jnp.tile(masks, (1, b_step))           # (9, LANE) per-image repeat


def _choose_batch_packing(n, p_pad):
    """Images packed into the lane axis per grid step.

    Pack up to ~2048 lanes per step, but keep >= 2 grid steps when n >= 2 so
    v7x's two TensorCores both get work (neutral on v5e/v6e).
    """
    if n <= 1:
        return 1
    b_step = max(1, min(n // 2, 2048 // p_pad))
    while n % b_step != 0:
        b_step -= 1
    return max(b_step, 1)


def reversed_csp_pallas(x, kp, *, depth):
    """x: (N, C_in, H, W) NCHW; kp: folded kernel params (make_kernel_params)."""
    assert depth >= 1
    N, C_in, H, W = x.shape
    P = H * W
    C = kp["w_in"].shape[0]
    C_in_pad = kp["w_in"].shape[1]

    # Pad input channels to match the zero-padded w_in columns (full sublanes).
    if C_in_pad > C_in:
        x = jnp.pad(x, ((0, 0), (0, C_in_pad - C_in), (0, 0), (0, 0)))
    x_flat = x.reshape(N, C_in_pad, P)

    # Pad the spatial (lane) axis to a multiple of 128; padded columns produce
    # garbage that is sliced off, and the tap masks keep real columns from
    # ever reading them.
    P_pad = pl.cdiv(P, 128) * 128
    if P_pad > P:
        x_flat = jnp.pad(x_flat, ((0, 0), (0, 0), (0, P_pad - P)))

    # Pack b_step images into the lane axis per grid step.
    b_step = _choose_batch_packing(N, P_pad)
    num_steps = N // b_step
    LANE = b_step * P_pad
    x_packed = x_flat.reshape(num_steps, b_step, C_in_pad, P_pad)
    x_packed = jnp.transpose(x_packed, (0, 2, 1, 3)).reshape(
        num_steps, C_in_pad, LANE)

    masks = _make_tap_masks(H, W, P_pad, b_step)          # (9, LANE) f32

    inputs = [
        x_packed, masks,
        kp["w_in"], kp["b_in"],
        kp["w1"], kp["b1"],
        kp["w3"], kp["b3"],
        kp["w_byp"], kp["b_byp"],
        kp["a_bn1"], kp["b_bn1"],
        kp["w_out1"], kp["w_out2"], kp["b_out"],
    ]

    def _full(a):
        return pl.BlockSpec(a.shape, lambda n, _r=a.ndim: (0,) * _r)

    in_specs = ([pl.BlockSpec((None, C_in_pad, LANE), lambda n: (n, 0, 0))]
                + [_full(a) for a in inputs[1:]])

    kernel = functools.partial(_rcsp_kernel, img_w=W, lane=LANE, depth=depth)

    out = pl.pallas_call(
        kernel,
        out_shape=jax.ShapeDtypeStruct((num_steps, C, LANE), x.dtype),
        grid=(num_steps,),
        in_specs=in_specs,
        out_specs=pl.BlockSpec((None, C, LANE), lambda n: (n, 0, 0)),
        compiler_params=pltpu.CompilerParams(
            dimension_semantics=("parallel",),      # batch chunks independent
            vmem_limit_bytes=32 * 1024 * 1024,      # explicit; raise if tiles grow
        ),
    )(*inputs)

    # (num_steps, C, LANE) -> (N, C, H, W), dropping lane padding.
    out = out.reshape(num_steps, C, b_step, P_pad)
    out = jnp.transpose(out, (0, 2, 1, 3)).reshape(N, C, P_pad)
    return out[:, :, :P].reshape(N, C, H, W)


# --------------------------------------------------------------------------
# Host-side parameter construction + Conv/BN folding
# --------------------------------------------------------------------------
def _bn_params(key, c):
    k1, k2, k3, k4 = jax.random.split(key, 4)
    gamma = 1.0 + 0.1 * jax.random.normal(k1, (c,), jnp.float32)
    beta = 0.1 * jax.random.normal(k2, (c,), jnp.float32)
    mean = 0.1 * jax.random.normal(k3, (c,), jnp.float32)
    var = jax.random.uniform(k4, (c,), jnp.float32, 0.5, 1.5)
    return (gamma, beta, mean, var)


def _conv_bn_params(key, c_in, c_out, k):
    kw, kb, kbn = jax.random.split(key, 3)
    w = 0.2 * jax.random.normal(kw, (c_out, c_in, k, k), jnp.float32)
    b = 0.1 * jax.random.normal(kb, (c_out,), jnp.float32)
    return {"w": w, "b": b, "bn": _bn_params(kbn, c_out)}


def make_params(key, c_in, c_out, depth):
    keys = jax.random.split(key, depth + 4)
    p = {"in_conv": _conv_bn_params(keys[0], c_in, c_out, 1)}
    main = []
    for d in range(depth):
        k1, k2 = jax.random.split(keys[1 + d])
        main.append({"c1": _conv_bn_params(k1, c_out, c_out, 1),
                     "c3": _conv_bn_params(k2, c_out, c_out, 3)})
    p["main"] = main
    p["bypass"] = {"w": 0.2 * jax.random.normal(keys[depth + 1],
                                                (c_out, c_out, 1, 1), jnp.float32)}
    p["bn_outer"] = _bn_params(keys[depth + 2], 2 * c_out)
    p["out_conv"] = _conv_bn_params(keys[depth + 3], 2 * c_out, c_out, 1)
    return p


def _fold_conv_bn(w, b, bn, eps):
    gamma, beta, mean, var = bn
    a = gamma / jnp.sqrt(var + eps)
    w_f = w * a.reshape((-1,) + (1,) * (w.ndim - 1))
    b_f = a * b + (beta - a * mean)
    return w_f, b_f


def make_kernel_params(p, c_in, c_out, depth):
    """Fold Conv+BN, pad C_in to a sublane multiple, reshape the 3x3 weights
    to the im2col layout (C, 9C) and cast all MXU weights to bf16."""
    C = c_out
    bf16 = jnp.bfloat16
    c_in_pad = -(-c_in // 8) * 8
    kp = {}

    w, b = _fold_conv_bn(p["in_conv"]["w"], p["in_conv"]["b"],
                         p["in_conv"]["bn"], _CBA_EPS)
    w = w.reshape(C, c_in)
    w = jnp.pad(w, ((0, 0), (0, c_in_pad - c_in)))        # zero columns
    kp["w_in"] = w.astype(bf16)
    kp["b_in"] = b.reshape(C, 1)

    w1s, b1s, w3s, b3s = [], [], [], []
    for d in range(depth):
        blk = p["main"][d]
        w1, b1 = _fold_conv_bn(blk["c1"]["w"], blk["c1"]["b"], blk["c1"]["bn"], _CBA_EPS)
        w1s.append(w1.reshape(C, C)); b1s.append(b1.reshape(C, 1))
        w3, b3 = _fold_conv_bn(blk["c3"]["w"], blk["c3"]["b"], blk["c3"]["bn"], _CBA_EPS)
        # (C_out, C_in, 3, 3) -> (C_out, kh, kw, C_in) -> (C_out, 9*C_in):
        # column index = (kh*3+kw)*C + c_in, matching the in-kernel tap stack.
        w3s.append(jnp.transpose(w3, (0, 2, 3, 1)).reshape(C, 9 * C))
        b3s.append(b3.reshape(C, 1))
    kp["w1"] = jnp.stack(w1s).astype(bf16)    # (depth, C, C)
    kp["b1"] = jnp.stack(b1s)                 # (depth, C, 1)
    kp["w3"] = jnp.stack(w3s).astype(bf16)    # (depth, C, 9C)
    kp["b3"] = jnp.stack(b3s)                 # (depth, C, 1)

    # Outer BN over the 2C-channel concat, split into the h1/h2 halves.
    gamma, beta, mean, var = p["bn_outer"]
    a = gamma / jnp.sqrt(var + _OUTER_EPS)
    bb = beta - a * mean
    kp["a_bn1"] = a[:C].reshape(C, 1)
    kp["b_bn1"] = bb[:C].reshape(C, 1)
    kp["w_byp"] = (p["bypass"]["w"].reshape(C, C) * a[C:][:, None]).astype(bf16)
    kp["b_byp"] = bb[C:].reshape(C, 1)

    wo, bo = _fold_conv_bn(p["out_conv"]["w"], p["out_conv"]["b"],
                           p["out_conv"]["bn"], _CBA_EPS)
    wo = wo.reshape(C, 2 * C)
    kp["w_out1"] = wo[:, :C].astype(bf16)
    kp["w_out2"] = wo[:, C:].astype(bf16)
    kp["b_out"] = bo.reshape(C, 1)
    return kp


# --------------------------------------------------------------------------
# Pure-JAX reference matching the PyTorch forward (eval-mode BN, f32)
# --------------------------------------------------------------------------
def _conv_ref(x, w, pad):
    return lax.conv_general_dilated(
        x, w, (1, 1), [(pad, pad), (pad, pad)],
        dimension_numbers=("NCHW", "OIHW", "NCHW"),
        precision=jax.lax.Precision.HIGHEST)


def _bn_ref(x, bn, eps):
    gamma, beta, mean, var = bn
    inv = 1.0 / jnp.sqrt(var + eps)
    return (x - mean[None, :, None, None]) * (gamma * inv)[None, :, None, None] \
        + beta[None, :, None, None]


def _conv_bn_act_ref(x, cp, pad):
    y = _conv_ref(x, cp["w"], pad) + cp["b"][None, :, None, None]
    return _mish_ref(_bn_ref(y, cp["bn"], _CBA_EPS))


def reversed_csp_reference(x, p, depth):
    x0 = _conv_bn_act_ref(x, p["in_conv"], 0)
    h = x0
    for d in range(depth):
        h = _conv_bn_act_ref(h, p["main"][d]["c1"], 0)
        h = _conv_bn_act_ref(h, p["main"][d]["c3"], 1)
    h1 = h
    h2 = _conv_ref(x0, p["bypass"]["w"], 0)
    hc = _mish_ref(_bn_ref(jnp.concatenate([h1, h2], axis=1), p["bn_outer"], _OUTER_EPS))
    return _conv_bn_act_ref(hc, p["out_conv"], 0)


if __name__ == "__main__":
    key = jax.random.PRNGKey(0)
    kx, kparams = jax.random.split(key)

    N, C_in, C_out, H, W, depth = 2, 4, 8, 16, 16, 2

    x = jax.random.normal(kx, (N, C_in, H, W), dtype=jnp.float32)
    params = make_params(kparams, C_in, C_out, depth)
    kparams_folded = make_kernel_params(params, C_in, C_out, depth)

    out = reversed_csp_pallas(x, kparams_folded, depth=depth)
    out = jax.block_until_ready(out)

    ref = reversed_csp_reference(x, params, depth)
    assert out.shape == (N, C_out, H, W)
    # Tolerance widened vs the pure-f32 version: the kernel uses bf16 MXU
    # operands and an approx-reciprocal Mish, while the reference is exact f32.
    assert jnp.allclose(out, ref, atol=4e-2, rtol=4e-2), (
        "mismatch vs reference, max abs err = %e"
        % float(jnp.max(jnp.abs(out - ref))))

    print("KERNEL_OK")
</pallas_src>

<mosaic_0001>
module attributes {stable_mosaic.version = 11 : i64} {
  func.func @_rcsp_kernel(%arg0: i32, %arg1: memref<1x8x256xf32, #tpu.memory_space<vmem>>, %arg2: memref<9x256xf32, #tpu.memory_space<vmem>>, %arg3: memref<8x8xbf16, #tpu.memory_space<vmem>>, %arg4: memref<8x1xf32, #tpu.memory_space<vmem>>, %arg5: memref<2x8x8xbf16, #tpu.memory_space<vmem>>, %arg6: memref<2x8x1xf32, #tpu.memory_space<vmem>>, %arg7: memref<2x8x72xbf16, #tpu.memory_space<vmem>>, %arg8: memref<2x8x1xf32, #tpu.memory_space<vmem>>, %arg9: memref<8x8xbf16, #tpu.memory_space<vmem>>, %arg10: memref<8x1xf32, #tpu.memory_space<vmem>>, %arg11: memref<8x1xf32, #tpu.memory_space<vmem>>, %arg12: memref<8x1xf32, #tpu.memory_space<vmem>>, %arg13: memref<8x8xbf16, #tpu.memory_space<vmem>>, %arg14: memref<8x8xbf16, #tpu.memory_space<vmem>>, %arg15: memref<8x1xf32, #tpu.memory_space<vmem>>, %arg16: memref<1x8x256xf32, #tpu.memory_space<vmem>>) attributes {dimension_semantics = [#tpu.dimension_semantics<parallel>], iteration_bounds = array<i64: 2>, scalar_prefetch = 0 : i64, scratch_operands = 0 : i64, tpu.core_type = #tpu.core_type<tc>, window_params = [{transform_indices = @transform_0, window_bounds = array<i64: 1, 8, 256>}, {pipeline_mode = #tpu.pipeline_mode<synchronous>, transform_indices = @transform_1, window_bounds = array<i64: 9, 256>}, {pipeline_mode = #tpu.pipeline_mode<synchronous>, transform_indices = @transform_2, window_bounds = array<i64: 8, 8>}, {pipeline_mode = #tpu.pipeline_mode<synchronous>, transform_indices = @transform_3, window_bounds = array<i64: 8, 1>}, {pipeline_mode = #tpu.pipeline_mode<synchronous>, transform_indices = @transform_4, window_bounds = array<i64: 2, 8, 8>}, {pipeline_mode = #tpu.pipeline_mode<synchronous>, transform_indices = @transform_5, window_bounds = array<i64: 2, 8, 1>}, {pipeline_mode = #tpu.pipeline_mode<synchronous>, transform_indices = @transform_6, window_bounds = array<i64: 2, 8, 72>}, {pipeline_mode = #tpu.pipeline_mode<synchronous>, transform_indices = @transform_7, window_bounds = array<i64: 2, 8, 1>}, {pipeline_mode = #tpu.pipeline_mode<synchronous>, transform_indices = @transform_8, window_bounds = array<i64: 8, 8>}, {pipeline_mode = #tpu.pipeline_mode<synchronous>, transform_indices = @transform_9, window_bounds = array<i64: 8, 1>}, {pipeline_mode = #tpu.pipeline_mode<synchronous>, transform_indices = @transform_10, window_bounds = array<i64: 8, 1>}, {pipeline_mode = #tpu.pipeline_mode<synchronous>, transform_indices = @transform_11, window_bounds = array<i64: 8, 1>}, {pipeline_mode = #tpu.pipeline_mode<synchronous>, transform_indices = @transform_12, window_bounds = array<i64: 8, 8>}, {pipeline_mode = #tpu.pipeline_mode<synchronous>, transform_indices = @transform_13, window_bounds = array<i64: 8, 8>}, {pipeline_mode = #tpu.pipeline_mode<synchronous>, transform_indices = @transform_14, window_bounds = array<i64: 8, 1>}, {transform_indices = @transform_15, window_bounds = array<i64: 1, 8, 256>}]} {
    %c0 = arith.constant 0 : index
    %c0_0 = arith.constant 0 : index
    %c0_1 = arith.constant 0 : index
    %0 = vector.load %arg1[%c0, %c0_0, %c0_1] : memref<1x8x256xf32, #tpu.memory_space<vmem>>, vector<1x8x256xf32>
    %1 = vector.shape_cast %0 : vector<1x8x256xf32> to vector<8x256xf32>
    %c0_2 = arith.constant 0 : index
    %c0_3 = arith.constant 0 : index
    %2 = vector.load %arg2[%c0_2, %c0_3] : memref<9x256xf32, #tpu.memory_space<vmem>>, vector<9x256xf32>
    %c0_4 = arith.constant 0 : index
    %c0_5 = arith.constant 0 : index
    %3 = vector.load %arg3[%c0_4, %c0_5] : memref<8x8xbf16, #tpu.memory_space<vmem>>, vector<8x8xbf16>
    %4 = arith.truncf %1 : vector<8x256xf32> to vector<8x256xbf16>
    %cst = arith.constant dense<0.000000e+00> : vector<8x256xf32>
    %5 = tpu.matmul %3, %4, %cst {dimension_numbers = #tpu.dot_dimension_numbers<[1], [0], [0], [1], [0, 0, 1, 1], [], []>} : vector<8x8xbf16>, vector<8x256xbf16>, vector<8x256xf32> -> vector<8x256xf32>
    %c0_6 = arith.constant 0 : index
    %c0_7 = arith.constant 0 : index
    %6 = vector.load %arg4[%c0_6, %c0_7] : memref<8x1xf32, #tpu.memory_space<vmem>>, vector<8x1xf32>
    %7 = vector.broadcast %6 : vector<8x1xf32> to vector<8x256xf32>
    %8 = arith.addf %5, %7 : vector<8x256xf32>
    %cst_8 = arith.constant 2.000000e+01 : f32
    %9 = vector.broadcast %cst_8 : f32 to vector<8x256xf32>
    %10 = arith.minimumf %8, %9 : vector<8x256xf32>
    %11 = math.exp %10 : vector<8x256xf32>
    %cst_9 = arith.constant 2.000000e+00 : f32
    %12 = vector.broadcast %cst_9 : f32 to vector<8x256xf32>
    %13 = arith.addf %11, %12 : vector<8x256xf32>
    %14 = arith.mulf %11, %13 : vector<8x256xf32>
    %15 = arith.mulf %8, %14 : vector<8x256xf32>
    %cst_10 = arith.constant 2.000000e+00 : f32
    %16 = vector.broadcast %cst_10 : f32 to vector<8x256xf32>
    %17 = arith.addf %14, %16 : vector<8x256xf32>
    %18 = tpu.reciprocal %17 {approx = true} : vector<8x256xf32> -> vector<8x256xf32>
    %19 = arith.mulf %15, %18 : vector<8x256xf32>
    %c0_11 = arith.constant 0 : index
    %c0_12 = arith.constant 0 : index
    %c0_13 = arith.constant 0 : index
    %20 = vector.load %arg5[%c0_11, %c0_12, %c0_13] : memref<2x8x8xbf16, #tpu.memory_space<vmem>>, vector<1x8x8xbf16>
    %21 = vector.shape_cast %20 : vector<1x8x8xbf16> to vector<8x8xbf16>
    %22 = arith.truncf %19 : vector<8x256xf32> to vector<8x256xbf16>
    %cst_14 = arith.constant dense<0.000000e+00> : vector<8x256xf32>
    %23 = tpu.matmul %21, %22, %cst_14 {dimension_numbers = #tpu.dot_dimension_numbers<[1], [0], [0], [1], [0, 0, 1, 1], [], []>} : vector<8x8xbf16>, vector<8x256xbf16>, vector<8x256xf32> -> vector<8x256xf32>
    %c0_15 = arith.constant 0 : index
    %c0_16 = arith.constant 0 : index
    %c0_17 = arith.constant 0 : index
    %24 = vector.load %arg6[%c0_15, %c0_16, %c0_17] : memref<2x8x1xf32, #tpu.memory_space<vmem>>, vector<1x8x1xf32>
    %25 = vector.shape_cast %24 : vector<1x8x1xf32> to vector<8x1xf32>
    %26 = vector.broadcast %25 : vector<8x1xf32> to vector<8x256xf32>
    %27 = arith.addf %23, %26 : vector<8x256xf32>
    %cst_18 = arith.constant 2.000000e+01 : f32
    %28 = vector.broadcast %cst_18 : f32 to vector<8x256xf32>
    %29 = arith.minimumf %27, %28 : vector<8x256xf32>
    %30 = math.exp %29 : vector<8x256xf32>
    %cst_19 = arith.constant 2.000000e+00 : f32
    %31 = vector.broadcast %cst_19 : f32 to vector<8x256xf32>
    %32 = arith.addf %30, %31 : vector<8x256xf32>
    %33 = arith.mulf %30, %32 : vector<8x256xf32>
    %34 = arith.mulf %27, %33 : vector<8x256xf32>
    %cst_20 = arith.constant 2.000000e+00 : f32
    %35 = vector.broadcast %cst_20 : f32 to vector<8x256xf32>
    %36 = arith.addf %33, %35 : vector<8x256xf32>
    %37 = tpu.reciprocal %36 {approx = true} : vector<8x256xf32> -> vector<8x256xf32>
    %38 = arith.mulf %34, %37 : vector<8x256xf32>
    %c17_i32 = arith.constant 17 : i32
    %39 = tpu.dynamic_rotate %38 by %c17_i32 dim 1 : vector<8x256xf32>, i32 -> vector<8x256xf32>
    %40 = vector.extract_strided_slice %2 {offsets = [0, 0], sizes = [1, 256], strides = [1, 1]} : vector<9x256xf32> to vector<1x256xf32>
    %41 = vector.broadcast %40 : vector<1x256xf32> to vector<8x256xf32>
    %42 = arith.mulf %39, %41 : vector<8x256xf32>
    %c16_i32 = arith.constant 16 : i32
    %43 = tpu.dynamic_rotate %38 by %c16_i32 dim 1 : vector<8x256xf32>, i32 -> vector<8x256xf32>
    %44 = vector.extract_strided_slice %2 {offsets = [1, 0], sizes = [1, 256], strides = [1, 1]} : vector<9x256xf32> to vector<1x256xf32>
    %45 = vector.broadcast %44 : vector<1x256xf32> to vector<8x256xf32>
    %46 = arith.mulf %43, %45 : vector<8x256xf32>
    %c15_i32 = arith.constant 15 : i32
    %47 = tpu.dynamic_rotate %38 by %c15_i32 dim 1 : vector<8x256xf32>, i32 -> vector<8x256xf32>
    %48 = vector.extract_strided_slice %2 {offsets = [2, 0], sizes = [1, 256], strides = [1, 1]} : vector<9x256xf32> to vector<1x256xf32>
    %49 = vector.broadcast %48 : vector<1x256xf32> to vector<8x256xf32>
    %50 = arith.mulf %47, %49 : vector<8x256xf32>
    %c1_i32 = arith.constant 1 : i32
    %51 = tpu.dynamic_rotate %38 by %c1_i32 dim 1 : vector<8x256xf32>, i32 -> vector<8x256xf32>
    %52 = vector.extract_strided_slice %2 {offsets = [3, 0], sizes = [1, 256], strides = [1, 1]} : vector<9x256xf32> to vector<1x256xf32>
    %53 = vector.broadcast %52 : vector<1x256xf32> to vector<8x256xf32>
    %54 = arith.mulf %51, %53 : vector<8x256xf32>
    %c255_i32 = arith.constant 255 : i32
    %55 = tpu.dynamic_rotate %38 by %c255_i32 dim 1 : vector<8x256xf32>, i32 -> vector<8x256xf32>
    %56 = vector.extract_strided_slice %2 {offsets = [5, 0], sizes = [1, 256], strides = [1, 1]} : vector<9x256xf32> to vector<1x256xf32>
    %57 = vector.broadcast %56 : vector<1x256xf32> to vector<8x256xf32>
    %58 = arith.mulf %55, %57 : vector<8x256xf32>
    %c241_i32 = arith.constant 241 : i32
    %59 = tpu.dynamic_rotate %38 by %c241_i32 dim 1 : vector<8x256xf32>, i32 -> vector<8x256xf32>
    %60 = vector.extract_strided_slice %2 {offsets = [6, 0], sizes = [1, 256], strides = [1, 1]} : vector<9x256xf32> to vector<1x256xf32>
    %61 = vector.broadcast %60 : vector<1x256xf32> to vector<8x256xf32>
    %62 = arith.mulf %59, %61 : vector<8x256xf32>
    %c240_i32 = arith.constant 240 : i32
    %63 = tpu.dynamic_rotate %38 by %c240_i32 dim 1 : vector<8x256xf32>, i32 -> vector<8x256xf32>
    %64 = vector.extract_strided_slice %2 {offsets = [7, 0], sizes = [1, 256], strides = [1, 1]} : vector<9x256xf32> to vector<1x256xf32>
    %65 = vector.broadcast %64 : vector<1x256xf32> to vector<8x256xf32>
    %66 = arith.mulf %63, %65 : vector<8x256xf32>
    %c239_i32 = arith.constant 239 : i32
    %67 = tpu.dynamic_rotate %38 by %c239_i32 dim 1 : vector<8x256xf32>, i32 -> vector<8x256xf32>
    %68 = vector.extract_strided_slice %2 {offsets = [8, 0], sizes = [1, 256], strides = [1, 1]} : vector<9x256xf32> to vector<1x256xf32>
    %69 = vector.broadcast %68 : vector<1x256xf32> to vector<8x256xf32>
    %70 = arith.mulf %67, %69 : vector<8x256xf32>
    %71 = tpu.concatenate %42, %46, %50, %54, %38, %58, %62, %66, %70 in 0 : vector<8x256xf32>, vector<8x256xf32>, vector<8x256xf32>, vector<8x256xf32>, vector<8x256xf32>, vector<8x256xf32>, vector<8x256xf32>, vector<8x256xf32>, vector<8x256xf32> -> vector<72x256xf32>
    %c0_21 = arith.constant 0 : index
    %c0_22 = arith.constant 0 : index
    %c0_23 = arith.constant 0 : index
    %72 = vector.load %arg7[%c0_21, %c0_22, %c0_23] : memref<2x8x72xbf16, #tpu.memory_space<vmem>>, vector<1x8x72xbf16>
    %73 = vector.shape_cast %72 : vector<1x8x72xbf16> to vector<8x72xbf16>
    %74 = arith.truncf %71 : vector<72x256xf32> to vector<72x256xbf16>
    %cst_24 = arith.constant dense<0.000000e+00> : vector<8x256xf32>
    %75 = tpu.matmul %73, %74, %cst_24 {dimension_numbers = #tpu.dot_dimension_numbers<[1], [0], [0], [1], [0, 0, 1, 1], [], []>} : vector<8x72xbf16>, vector<72x256xbf16>, vector<8x256xf32> -> vector<8x256xf32>
    %c0_25 = arith.constant 0 : index
    %c0_26 = arith.constant 0 : index
    %c0_27 = arith.constant 0 : index
    %76 = vector.load %arg8[%c0_25, %c0_26, %c0_27] : memref<2x8x1xf32, #tpu.memory_space<vmem>>, vector<1x8x1xf32>
    %77 = vector.shape_cast %76 : vector<1x8x1xf32> to vector<8x1xf32>
    %78 = vector.broadcast %77 : vector<8x1xf32> to vector<8x256xf32>
    %79 = arith.addf %75, %78 : vector<8x256xf32>
    %cst_28 = arith.constant 2.000000e+01 : f32
    %80 = vector.broadcast %cst_28 : f32 to vector<8x256xf32>
    %81 = arith.minimumf %79, %80 : vector<8x256xf32>
    %82 = math.exp %81 : vector<8x256xf32>
    %cst_29 = arith.constant 2.000000e+00 : f32
    %83 = vector.broadcast %cst_29 : f32 to vector<8x256xf32>
    %84 = arith.addf %82, %83 : vector<8x256xf32>
    %85 = arith.mulf %82, %84 : vector<8x256xf32>
    %86 = arith.mulf %79, %85 : vector<8x256xf32>
    %cst_30 = arith.constant 2.000000e+00 : f32
    %87 = vector.broadcast %cst_30 : f32 to vector<8x256xf32>
    %88 = arith.addf %85, %87 : vector<8x256xf32>
    %89 = tpu.reciprocal %88 {approx = true} : vector<8x256xf32> -> vector<8x256xf32>
    %90 = arith.mulf %86, %89 : vector<8x256xf32>
    %c1 = arith.constant 1 : index
    %c0_31 = arith.constant 0 : index
    %c0_32 = arith.constant 0 : index
    %91 = vector.load %arg5[%c1, %c0_31, %c0_32] : memref<2x8x8xbf16, #tpu.memory_space<vmem>>, vector<1x8x8xbf16>
    %92 = vector.shape_cast %91 : vector<1x8x8xbf16> to vector<8x8xbf16>
    %93 = arith.truncf %90 : vector<8x256xf32> to vector<8x256xbf16>
    %cst_33 = arith.constant dense<0.000000e+00> : vector<8x256xf32>
    %94 = tpu.matmul %92, %93, %cst_33 {dimension_numbers = #tpu.dot_dimension_numbers<[1], [0], [0], [1], [0, 0, 1, 1], [], []>} : vector<8x8xbf16>, vector<8x256xbf16>, vector<8x256xf32> -> vector<8x256xf32>
    %c1_34 = arith.constant 1 : index
    %c0_35 = arith.constant 0 : index
    %c0_36 = arith.constant 0 : index
    %95 = vector.load %arg6[%c1_34, %c0_35, %c0_36] : memref<2x8x1xf32, #tpu.memory_space<vmem>>, vector<1x8x1xf32>
    %96 = vector.shape_cast %95 : vector<1x8x1xf32> to vector<8x1xf32>
    %97 = vector.broadcast %96 : vector<8x1xf32> to vector<8x256xf32>
    %98 = arith.addf %94, %97 : vector<8x256xf32>
    %cst_37 = arith.constant 2.000000e+01 : f32
    %99 = vector.broadcast %cst_37 : f32 to vector<8x256xf32>
    %100 = arith.minimumf %98, %99 : vector<8x256xf32>
    %101 = math.exp %100 : vector<8x256xf32>
    %cst_38 = arith.constant 2.000000e+00 : f32
    %102 = vector.broadcast %cst_38 : f32 to vector<8x256xf32>
    %103 = arith.addf %101, %102 : vector<8x256xf32>
    %104 = arith.mulf %101, %103 : vector<8x256xf32>
    %105 = arith.mulf %98, %104 : vector<8x256xf32>
    %cst_39 = arith.constant 2.000000e+00 : f32
    %106 = vector.broadcast %cst_39 : f32 to vector<8x256xf32>
    %107 = arith.addf %104, %106 : vector<8x256xf32>
    %108 = tpu.reciprocal %107 {approx = true} : vector<8x256xf32> -> vector<8x256xf32>
    %109 = arith.mulf %105, %108 : vector<8x256xf32>
    %c17_i32_40 = arith.constant 17 : i32
    %110 = tpu.dynamic_rotate %109 by %c17_i32_40 dim 1 : vector<8x256xf32>, i32 -> vector<8x256xf32>
    %111 = vector.extract_strided_slice %2 {offsets = [0, 0], sizes = [1, 256], strides = [1, 1]} : vector<9x256xf32> to vector<1x256xf32>
    %112 = vector.broadcast %111 : vector<1x256xf32> to vector<8x256xf32>
    %113 = arith.mulf %110, %112 : vector<8x256xf32>
    %c16_i32_41 = arith.constant 16 : i32
    %114 = tpu.dynamic_rotate %109 by %c16_i32_41 dim 1 : vector<8x256xf32>, i32 -> vector<8x256xf32>
    %115 = vector.extract_strided_slice %2 {offsets = [1, 0], sizes = [1, 256], strides = [1, 1]} : vector<9x256xf32> to vector<1x256xf32>
    %116 = vector.broadcast %115 : vector<1x256xf32> to vector<8x256xf32>
    %117 = arith.mulf %114, %116 : vector<8x256xf32>
    %c15_i32_42 = arith.constant 15 : i32
    %118 = tpu.dynamic_rotate %109 by %c15_i32_42 dim 1 : vector<8x256xf32>, i32 -> vector<8x256xf32>
    %119 = vector.extract_strided_slice %2 {offsets = [2, 0], sizes = [1, 256], strides = [1, 1]} : vector<9x256xf32> to vector<1x256xf32>
    %120 = vector.broadcast %119 : vector<1x256xf32> to vector<8x256xf32>
    %121 = arith.mulf %118, %120 : vector<8x256xf32>
    %c1_i32_43 = arith.constant 1 : i32
    %122 = tpu.dynamic_rotate %109 by %c1_i32_43 dim 1 : vector<8x256xf32>, i32 -> vector<8x256xf32>
    %123 = vector.extract_strided_slice %2 {offsets = [3, 0], sizes = [1, 256], strides = [1, 1]} : vector<9x256xf32> to vector<1x256xf32>
    %124 = vector.broadcast %123 : vector<1x256xf32> to vector<8x256xf32>
    %125 = arith.mulf %122, %124 : vector<8x256xf32>
    %c255_i32_44 = arith.constant 255 : i32
    %126 = tpu.dynamic_rotate %109 by %c255_i32_44 dim 1 : vector<8x256xf32>, i32 -> vector<8x256xf32>
    %127 = vector.extract_strided_slice %2 {offsets = [5, 0], sizes = [1, 256], strides = [1, 1]} : vector<9x256xf32> to vector<1x256xf32>
    %128 = vector.broadcast %127 : vector<1x256xf32> to vector<8x256xf32>
    %129 = arith.mulf %126, %128 : vector<8x256xf32>
    %c241_i32_45 = arith.constant 241 : i32
    %130 = tpu.dynamic_rotate %109 by %c241_i32_45 dim 1 : vector<8x256xf32>, i32 -> vector<8x256xf32>
    %131 = vector.extract_strided_slice %2 {offsets = [6, 0], sizes = [1, 256], strides = [1, 1]} : vector<9x256xf32> to vector<1x256xf32>
    %132 = vector.broadcast %131 : vector<1x256xf32> to vector<8x256xf32>
    %133 = arith.mulf %130, %132 : vector<8x256xf32>
    %c240_i32_46 = arith.constant 240 : i32
    %134 = tpu.dynamic_rotate %109 by %c240_i32_46 dim 1 : vector<8x256xf32>, i32 -> vector<8x256xf32>
    %135 = vector.extract_strided_slice %2 {offsets = [7, 0], sizes = [1, 256], strides = [1, 1]} : vector<9x256xf32> to vector<1x256xf32>
    %136 = vector.broadcast %135 : vector<1x256xf32> to vector<8x256xf32>
    %137 = arith.mulf %134, %136 : vector<8x256xf32>
    %c239_i32_47 = arith.constant 239 : i32
    %138 = tpu.dynamic_rotate %109 by %c239_i32_47 dim 1 : vector<8x256xf32>, i32 -> vector<8x256xf32>
    %139 = vector.extract_strided_slice %2 {offsets = [8, 0], sizes = [1, 256], strides = [1, 1]} : vector<9x256xf32> to vector<1x256xf32>
    %140 = vector.broadcast %139 : vector<1x256xf32> to vector<8x256xf32>
    %141 = arith.mulf %138, %140 : vector<8x256xf32>
    %142 = tpu.concatenate %113, %117, %121, %125, %109, %129, %133, %137, %141 in 0 : vector<8x256xf32>, vector<8x256xf32>, vector<8x256xf32>, vector<8x256xf32>, vector<8x256xf32>, vector<8x256xf32>, vector<8x256xf32>, vector<8x256xf32>, vector<8x256xf32> -> vector<72x256xf32>
    %c1_48 = arith.constant 1 : index
    %c0_49 = arith.constant 0 : index
    %c0_50 = arith.constant 0 : index
    %143 = vector.load %arg7[%c1_48, %c0_49, %c0_50] : memref<2x8x72xbf16, #tpu.memory_space<vmem>>, vector<1x8x72xbf16>
    %144 = vector.shape_cast %143 : vector<1x8x72xbf16> to vector<8x72xbf16>
    %145 = arith.truncf %142 : vector<72x256xf32> to vector<72x256xbf16>
    %cst_51 = arith.constant dense<0.000000e+00> : vector<8x256xf32>
    %146 = tpu.matmul %144, %145, %cst_51 {dimension_numbers = #tpu.dot_dimension_numbers<[1], [0], [0], [1], [0, 0, 1, 1], [], []>} : vector<8x72xbf16>, vector<72x256xbf16>, vector<8x256xf32> -> vector<8x256xf32>
    %c1_52 = arith.constant 1 : index
    %c0_53 = arith.constant 0 : index
    %c0_54 = arith.constant 0 : index
    %147 = vector.load %arg8[%c1_52, %c0_53, %c0_54] : memref<2x8x1xf32, #tpu.memory_space<vmem>>, vector<1x8x1xf32>
    %148 = vector.shape_cast %147 : vector<1x8x1xf32> to vector<8x1xf32>
    %149 = vector.broadcast %148 : vector<8x1xf32> to vector<8x256xf32>
    %150 = arith.addf %146, %149 : vector<8x256xf32>
    %cst_55 = arith.constant 2.000000e+01 : f32
    %151 = vector.broadcast %cst_55 : f32 to vector<8x256xf32>
    %152 = arith.minimumf %150, %151 : vector<8x256xf32>
    %153 = math.exp %152 : vector<8x256xf32>
    %cst_56 = arith.constant 2.000000e+00 : f32
    %154 = vector.broadcast %cst_56 : f32 to vector<8x256xf32>
    %155 = arith.addf %153, %154 : vector<8x256xf32>
    %156 = arith.mulf %153, %155 : vector<8x256xf32>
    %157 = arith.mulf %150, %156 : vector<8x256xf32>
    %cst_57 = arith.constant 2.000000e+00 : f32
    %158 = vector.broadcast %cst_57 : f32 to vector<8x256xf32>
    %159 = arith.addf %156, %158 : vector<8x256xf32>
    %160 = tpu.reciprocal %159 {approx = true} : vector<8x256xf32> -> vector<8x256xf32>
    %161 = arith.mulf %157, %160 : vector<8x256xf32>
    %c0_58 = arith.constant 0 : index
    %c0_59 = arith.constant 0 : index
    %162 = vector.load %arg11[%c0_58, %c0_59] : memref<8x1xf32, #tpu.memory_space<vmem>>, vector<8x1xf32>
    %163 = vector.broadcast %162 : vector<8x1xf32> to vector<8x256xf32>
    %164 = arith.mulf %163, %161 : vector<8x256xf32>
    %c0_60 = arith.constant 0 : index
    %c0_61 = arith.constant 0 : index
    %165 = vector.load %arg12[%c0_60, %c0_61] : memref<8x1xf32, #tpu.memory_space<vmem>>, vector<8x1xf32>
    %166 = vector.broadcast %165 : vector<8x1xf32> to vector<8x256xf32>
    %167 = arith.addf %164, %166 : vector<8x256xf32>
    %cst_62 = arith.constant 2.000000e+01 : f32
    %168 = vector.broadcast %cst_62 : f32 to vector<8x256xf32>
    %169 = arith.minimumf %167, %168 : vector<8x256xf32>
    %170 = math.exp %169 : vector<8x256xf32>
    %cst_63 = arith.constant 2.000000e+00 : f32
    %171 = vector.broadcast %cst_63 : f32 to vector<8x256xf32>
    %172 = arith.addf %170, %171 : vector<8x256xf32>
    %173 = arith.mulf %170, %172 : vector<8x256xf32>
    %174 = arith.mulf %167, %173 : vector<8x256xf32>
    %cst_64 = arith.constant 2.000000e+00 : f32
    %175 = vector.broadcast %cst_64 : f32 to vector<8x256xf32>
    %176 = arith.addf %173, %175 : vector<8x256xf32>
    %177 = tpu.reciprocal %176 {approx = true} : vector<8x256xf32> -> vector<8x256xf32>
    %178 = arith.mulf %174, %177 : vector<8x256xf32>
    %c0_65 = arith.constant 0 : index
    %c0_66 = arith.constant 0 : index
    %179 = vector.load %arg9[%c0_65, %c0_66] : memref<8x8xbf16, #tpu.memory_space<vmem>>, vector<8x8xbf16>
    %180 = arith.truncf %19 : vector<8x256xf32> to vector<8x256xbf16>
    %cst_67 = arith.constant dense<0.000000e+00> : vector<8x256xf32>
    %181 = tpu.matmul %179, %180, %cst_67 {dimension_numbers = #tpu.dot_dimension_numbers<[1], [0], [0], [1], [0, 0, 1, 1], [], []>} : vector<8x8xbf16>, vector<8x256xbf16>, vector<8x256xf32> -> vector<8x256xf32>
    %c0_68 = arith.constant 0 : index
    %c0_69 = arith.constant 0 : index
    %182 = vector.load %arg10[%c0_68, %c0_69] : memref<8x1xf32, #tpu.memory_space<vmem>>, vector<8x1xf32>
    %183 = vector.broadcast %182 : vector<8x1xf32> to vector<8x256xf32>
    %184 = arith.addf %181, %183 : vector<8x256xf32>
    %cst_70 = arith.constant 2.000000e+01 : f32
    %185 = vector.broadcast %cst_70 : f32 to vector<8x256xf32>
    %186 = arith.minimumf %184, %185 : vector<8x256xf32>
    %187 = math.exp %186 : vector<8x256xf32>
    %cst_71 = arith.constant 2.000000e+00 : f32
    %188 = vector.broadcast %cst_71 : f32 to vector<8x256xf32>
    %189 = arith.addf %187, %188 : vector<8x256xf32>
    %190 = arith.mulf %187, %189 : vector<8x256xf32>
    %191 = arith.mulf %184, %190 : vector<8x256xf32>
    %cst_72 = arith.constant 2.000000e+00 : f32
    %192 = vector.broadcast %cst_72 : f32 to vector<8x256xf32>
    %193 = arith.addf %190, %192 : vector<8x256xf32>
    %194 = tpu.reciprocal %193 {approx = true} : vector<8x256xf32> -> vector<8x256xf32>
    %195 = arith.mulf %191, %194 : vector<8x256xf32>
    %c0_73 = arith.constant 0 : index
    %c0_74 = arith.constant 0 : index
    %196 = vector.load %arg13[%c0_73, %c0_74] : memref<8x8xbf16, #tpu.memory_space<vmem>>, vector<8x8xbf16>
    %197 = arith.truncf %178 : vector<8x256xf32> to vector<8x256xbf16>
    %cst_75 = arith.constant dense<0.000000e+00> : vector<8x256xf32>
    %198 = tpu.matmul %196, %197, %cst_75 {dimension_numbers = #tpu.dot_dimension_numbers<[1], [0], [0], [1], [0, 0, 1, 1], [], []>} : vector<8x8xbf16>, vector<8x256xbf16>, vector<8x256xf32> -> vector<8x256xf32>
    %c0_76 = arith.constant 0 : index
    %c0_77 = arith.constant 0 : index
    %199 = vector.load %arg14[%c0_76, %c0_77] : memref<8x8xbf16, #tpu.memory_space<vmem>>, vector<8x8xbf16>
    %200 = arith.truncf %195 : vector<8x256xf32> to vector<8x256xbf16>
    %cst_78 = arith.constant dense<0.000000e+00> : vector<8x256xf32>
    %201 = tpu.matmul %199, %200, %cst_78 {dimension_numbers = #tpu.dot_dimension_numbers<[1], [0], [0], [1], [0, 0, 1, 1], [], []>} : vector<8x8xbf16>, vector<8x256xbf16>, vector<8x256xf32> -> vector<8x256xf32>
    %202 = arith.addf %198, %201 : vector<8x256xf32>
    %c0_79 = arith.constant 0 : index
    %c0_80 = arith.constant 0 : index
    %203 = vector.load %arg15[%c0_79, %c0_80] : memref<8x1xf32, #tpu.memory_space<vmem>>, vector<8x1xf32>
    %204 = vector.broadcast %203 : vector<8x1xf32> to vector<8x256xf32>
    %205 = arith.addf %202, %204 : vector<8x256xf32>
    %cst_81 = arith.constant 2.000000e+01 : f32
    %206 = vector.broadcast %cst_81 : f32 to vector<8x256xf32>
    %207 = arith.minimumf %205, %206 : vector<8x256xf32>
    %208 = math.exp %207 : vector<8x256xf32>
    %cst_82 = arith.constant 2.000000e+00 : f32
    %209 = vector.broadcast %cst_82 : f32 to vector<8x256xf32>
    %210 = arith.addf %208, %209 : vector<8x256xf32>
    %211 = arith.mulf %208, %210 : vector<8x256xf32>
    %212 = arith.mulf %205, %211 : vector<8x256xf32>
    %cst_83 = arith.constant 2.000000e+00 : f32
    %213 = vector.broadcast %cst_83 : f32 to vector<8x256xf32>
    %214 = arith.addf %211, %213 : vector<8x256xf32>
    %215 = tpu.reciprocal %214 {approx = true} : vector<8x256xf32> -> vector<8x256xf32>
    %216 = arith.mulf %212, %215 : vector<8x256xf32>
    %c0_84 = arith.constant 0 : index
    %c0_85 = arith.constant 0 : index
    %c0_86 = arith.constant 0 : index
    %217 = vector.load %arg16[%c0_84, %c0_85, %c0_86] : memref<1x8x256xf32, #tpu.memory_space<vmem>>, vector<1x8x256xf32>
    %218 = vector.shape_cast %217 : vector<1x8x256xf32> to vector<8x256xf32>
    %219 = vector.shape_cast %216 : vector<8x256xf32> to vector<1x8x256xf32>
    tpu.vector_store %arg16[%c0_84, %c0_85, %c0_86], %219 {strides = array<i32>} : memref<1x8x256xf32, #tpu.memory_space<vmem>>, vector<1x8x256xf32>,
    return
  }
  func.func @transform_0(%arg0: i32) -> (i32, i32, i32) {
    %c0_i32 = arith.constant 0 : i32
    %c0_i32_0 = arith.constant 0 : i32
    %c0_i32_1 = arith.constant 0 : i32
    return %arg0, %c0_i32, %c0_i32_0 : i32, i32, i32
  }
  func.func @transform_1(%arg0: i32) -> (i32, i32) {
    %c0_i32 = arith.constant 0 : i32
    %c0_i32_0 = arith.constant 0 : i32
    %c0_i32_1 = arith.constant 0 : i32
    return %c0_i32, %c0_i32_0 : i32, i32
  }
  func.func @transform_2(%arg0: i32) -> (i32, i32) {
    %c0_i32 = arith.constant 0 : i32
    %c0_i32_0 = arith.constant 0 : i32
    %c0_i32_1 = arith.constant 0 : i32
    return %c0_i32, %c0_i32_0 : i32, i32
  }
  func.func @transform_3(%arg0: i32) -> (i32, i32) {
    %c0_i32 = arith.constant 0 : i32
    %c0_i32_0 = arith.constant 0 : i32
    %c0_i32_1 = arith.constant 0 : i32
    return %c0_i32, %c0_i32_0 : i32, i32
  }
  func.func @transform_4(%arg0: i32) -> (i32, i32, i32) {
    %c0_i32 = arith.constant 0 : i32
    %c0_i32_0 = arith.constant 0 : i32
    %c0_i32_1 = arith.constant 0 : i32
    %c0_i32_2 = arith.constant 0 : i32
    return %c0_i32, %c0_i32_0, %c0_i32_1 : i32, i32, i32
  }
  func.func @transform_5(%arg0: i32) -> (i32, i32, i32) {
    %c0_i32 = arith.constant 0 : i32
    %c0_i32_0 = arith.constant 0 : i32
    %c0_i32_1 = arith.constant 0 : i32
    %c0_i32_2 = arith.constant 0 : i32
    return %c0_i32, %c0_i32_0, %c0_i32_1 : i32, i32, i32
  }
  func.func @transform_6(%arg0: i32) -> (i32, i32, i32) {
    %c0_i32 = arith.constant 0 : i32
    %c0_i32_0 = arith.constant 0 : i32
    %c0_i32_1 = arith.constant 0 : i32
    %c0_i32_2 = arith.constant 0 : i32
    return %c0_i32, %c0_i32_0, %c0_i32_1 : i32, i32, i32
  }
  func.func @transform_7(%arg0: i32) -> (i32, i32, i32) {
    %c0_i32 = arith.constant 0 : i32
    %c0_i32_0 = arith.constant 0 : i32
    %c0_i32_1 = arith.constant 0 : i32
    %c0_i32_2 = arith.constant 0 : i32
    return %c0_i32, %c0_i32_0, %c0_i32_1 : i32, i32, i32
  }
  func.func @transform_8(%arg0: i32) -> (i32, i32) {
    %c0_i32 = arith.constant 0 : i32
    %c0_i32_0 = arith.constant 0 : i32
    %c0_i32_1 = arith.constant 0 : i32
    return %c0_i32, %c0_i32_0 : i32, i32
  }
  func.func @transform_9(%arg0: i32) -> (i32, i32) {
    %c0_i32 = arith.constant 0 : i32
    %c0_i32_0 = arith.constant 0 : i32
    %c0_i32_1 = arith.constant 0 : i32
    return %c0_i32, %c0_i32_0 : i32, i32
  }
  func.func @transform_10(%arg0: i32) -> (i32, i32) {
    %c0_i32 = arith.constant 0 : i32
    %c0_i32_0 = arith.constant 0 : i32
    %c0_i32_1 = arith.constant 0 : i32
    return %c0_i32, %c0_i32_0 : i32, i32
  }
  func.func @transform_11(%arg0: i32) -> (i32, i32) {
    %c0_i32 = arith.constant 0 : i32
    %c0_i32_0 = arith.constant 0 : i32
    %c0_i32_1 = arith.constant 0 : i32
    return %c0_i32, %c0_i32_0 : i32, i32
  }
  func.func @transform_12(%arg0: i32) -> (i32, i32) {
    %c0_i32 = arith.constant 0 : i32
    %c0_i32_0 = arith.constant 0 : i32
    %c0_i32_1 = arith.constant 0 : i32
    return %c0_i32, %c0_i32_0 : i32, i32
  }
  func.func @transform_13(%arg0: i32) -> (i32, i32) {
    %c0_i32 = arith.constant 0 : i32
    %c0_i32_0 = arith.constant 0 : i32
    %c0_i32_1 = arith.constant 0 : i32
    return %c0_i32, %c0_i32_0 : i32, i32
  }
  func.func @transform_14(%arg0: i32) -> (i32, i32) {
    %c0_i32 = arith.constant 0 : i32
    %c0_i32_0 = arith.constant 0 : i32
    %c0_i32_1 = arith.constant 0 : i32
    return %c0_i32, %c0_i32_0 : i32, i32
  }
  func.func @transform_15(%arg0: i32) -> (i32, i32, i32) {
    %c0_i32 = arith.constant 0 : i32
    %c0_i32_0 = arith.constant 0 : i32
    %c0_i32_1 = arith.constant 0 : i32
    return %arg0, %c0_i32, %c0_i32_0 : i32, i32, i32
  }
}

</mosaic_0001>

<llo_original>
// kernel: tpu_custom_call.1
$region0: #{tpu_custom_call.1}
  #allocation0 [shape = 'u32[]', space=smem, size = 0x4, offset = 0x4, fixed_abs, tag = 'smem constant byte address 0x4 - core index']
  #allocation1 [shape = 'u32[72,128]{1,0:T(1,128)}', space=vmem, size = 0x9000, scoped, tag = 'internal scratch']
  %s0 = inlined_call_operand.vmem [shape: f32[2,8,256], index: 0, kind: input, shape index: {}]
  %s1 = inlined_call_operand.hbm [shape: f32[9,256], index: 1, kind: input, shape index: {}]
  %s2 = inlined_call_operand.vmem [shape: bf16[8,8], index: 2, kind: input, shape index: {}]
  %s3 = inlined_call_operand.vmem [shape: f32[8,1], index: 3, kind: input, shape index: {}]
  %s4 = inlined_call_operand.vmem [shape: bf16[2,8,8], index: 4, kind: input, shape index: {}]
  %s5 = inlined_call_operand.vmem [shape: f32[2,8,1], index: 5, kind: input, shape index: {}]
  %s6 = inlined_call_operand.vmem [shape: bf16[2,8,72], index: 6, kind: input, shape index: {}]
  %s7 = inlined_call_operand.vmem [shape: f32[2,8,1], index: 7, kind: input, shape index: {}]
  %s8 = inlined_call_operand.vmem [shape: bf16[8,8], index: 8, kind: input, shape index: {}]
  %s9 = inlined_call_operand.vmem [shape: f32[8,1], index: 9, kind: input, shape index: {}]
  %s10 = inlined_call_operand.vmem [shape: f32[8,1], index: 10, kind: input, shape index: {}]
  %s11 = inlined_call_operand.vmem [shape: f32[8,1], index: 11, kind: input, shape index: {}]
  %s12 = inlined_call_operand.vmem [shape: bf16[8,8], index: 12, kind: input, shape index: {}]
  %s13 = inlined_call_operand.vmem [shape: bf16[8,8], index: 13, kind: input, shape index: {}]
  %s14 = inlined_call_operand.vmem [shape: f32[8,1], index: 14, kind: input, shape index: {}]
  %s15 = inlined_call_operand.hbm [shape: f32[2,8,256], index: 15, kind: output, shape index: {}]
  %s16 = sld [smem:[#allocation0]]
  $region97: #{tpu_custom_call.1} parent=0
    _
  %s18 = ssub.s32 1, %s16
  %s19 = scalar_select 0, %s18, %s16
  $region1: #{tpu_custom_call.1} parent=0
    #allocation2 [shape = 'u8[16384]{0}', space=vmem, size = 0x4000, scoped, tag = 'input window, operand 1, single buffered']
    #allocation3 [shape = 's32[2]{0}', space=sflag, size = 0x8, scoped, tag = 'scoped memory for tpu_custom_call.1']
    #allocation4 [shape = 's32[2]{0}', space=sflag, size = 0x8, scoped, tag = 'scoped memory for tpu_custom_call.1']
    #allocation5 [shape = 'u8[16384]{0}', space=vmem, size = 0x4000, scoped, tag = 'output window, operand 0']
    %20 = vsyncpa [#allocation3], 0
    %21 = vsyncpa [#allocation4], 0
    %s22 = scalar_lea.sflag [#allocation4], 1
    %23 = vsyncpa %s22, 0
    loop: start=0, step=1, limit=4
    $region2: #{tpu_custom_call.1} parent=1 // loop_pre_header
      _
    $region3: #{tpu_custom_call.1} parent=1 // loop_header
      %s25 = sphi 0, %s29
      %p26 = scmp.ge.s32.totalorder %s25, 4
      %s35 = sphi 0, %s37
      %s38 = sphi 0, %s35
      %s39 = sphi 0, %s38
      %s55 = sphi 0, %s39
      %s59 = sphi 0, %s59
      %s61 = sphi 0, %s59
      %s62 = sphi 0, %s61
      %s76 = sphi 0, %s62
      %s80 = sphi 0, %s80
      %s82 = sphi 0, %s80
      %s83 = sphi 0, %s82
      %s97 = sphi 0, %s83
      %s101 = sphi 0, %s101
      %s103 = sphi 0, %s101
      %s104 = sphi 0, %s103
      %s118 = sphi 0, %s104
      %s122 = sphi 0, %s122
      %s124 = sphi 0, %s122
      %s125 = sphi 0, %s124
      %s139 = sphi 0, %s125
      %s143 = sphi 0, %s143
      %s145 = sphi 0, %s143
      %s146 = sphi 0, %s145
      %s160 = sphi 0, %s146
      %s164 = sphi 0, %s164
      %s166 = sphi 0, %s164
      %s167 = sphi 0, %s166
      %s181 = sphi 0, %s167
      %s185 = sphi 0, %s185
      %s187 = sphi 0, %s185
      %s188 = sphi 0, %s187
      %s202 = sphi 0, %s188
      %s206 = sphi 0, %s206
      %s208 = sphi 0, %s206
      %s209 = sphi 0, %s208
      %s223 = sphi 0, %s209
      %s227 = sphi 0, %s227
      %s229 = sphi 0, %s227
      %s230 = sphi 0, %s229
      %s244 = sphi 0, %s230
      %s248 = sphi 0, %s248
      %s250 = sphi 0, %s248
      %s251 = sphi 0, %s250
      %s265 = sphi 0, %s251
      %s269 = sphi 0, %s269
      %s271 = sphi 0, %s269
      %s272 = sphi 0, %s271
      %s286 = sphi 0, %s272
      %s290 = sphi 0, %s290
      %s292 = sphi 0, %s290
      %s293 = sphi 0, %s292
      %s307 = sphi 0, %s293
      %s311 = sphi 0, %s311
      %s313 = sphi 0, %s311
      %s314 = sphi 0, %s313
      %s328 = sphi 0, %s314
      %s332 = sphi 0, %s332
      %s334 = sphi 0, %s332
      %s335 = sphi 0, %s334
      %s349 = sphi 0, %s335
      %s355 = sphi 0, %s357
      %s358 = sphi 0, %s355
      %s359 = sphi 0, %s358
      %s375 = sphi 0, %s359
    $region4: #{tpu_custom_call.1} parent=1 // loop_header_branch
      %28 = sbr.rel (%p26) target = $region8
    $region5: #{tpu_custom_call.1} parent=1 // loop_body
      %s30 = ssub.s32 %s25, 1
      %s31 = ssub.s32 %s25, 2
      %s32 = sadd.s32 %s25, 1
      %s33 = ssub.s32 %s25, %s32
      %p34 = scmp.eq.s32.totalorder %s33, 0
      %s36 = sadd.s32 %s35, 1
      %s37 = scalar_select %p34, %s35, %s36
      %p40 = pneg %p34
      %p41 = scmp.eq.s32.totalorder %s25, 1
      %p42 = por %p40, %p41
      %p43 = scmp.ne.s32.totalorder %s35, %s38
      %p44 = scmp.eq.s32.totalorder %s25, 0
      %p45 = por %p43, %p44
      %p46 = scmp.ne.s32.totalorder %s35, %s38
      %p47 = scmp.eq.s32.totalorder %s30, 1
      %p48 = por %p46, %p47
      %p49 = scmp.ne.s32.totalorder %s38, %s39
      %p50 = scmp.eq.s32.totalorder %s30, 0
      %p51 = por %p49, %p50
      %p52 = scmp.ne.s32.totalorder %s38, %s39
      %p53 = scmp.eq.s32.totalorder %s31, 1
      %p54 = por %p52, %p53
      %p56 = scmp.ne.s32.totalorder %s39, %s55
      %p57 = scmp.eq.s32.totalorder %s31, 0
      %p58 = por %p56, %p57
      %s60 = sadd.s32 %s59, 1
      %p63 = scmp.eq.s32.totalorder %s25, 1
      %p64 = scmp.ne.s32.totalorder %s59, %s61
      %p65 = scmp.eq.s32.totalorder %s25, 0
      %p66 = por %p64, %p65
      %p67 = scmp.ne.s32.totalorder %s59, %s61
      %p68 = scmp.eq.s32.totalorder %s30, 1
      %p69 = por %p67, %p68
      %p70 = scmp.ne.s32.totalorder %s61, %s62
      %p71 = scmp.eq.s32.totalorder %s30, 0
      %p72 = por %p70, %p71
      %p73 = scmp.ne.s32.totalorder %s61, %s62
      %p74 = scmp.eq.s32.totalorder %s31, 1
      %p75 = por %p73, %p74
      %p77 = scmp.ne.s32.totalorder %s62, %s76
      %p78 = scmp.eq.s32.totalorder %s31, 0
      %p79 = por %p77, %p78
      %s81 = sadd.s32 %s80, 1
      %p84 = scmp.eq.s32.totalorder %s25, 1
      %p85 = scmp.ne.s32.totalorder %s80, %s82
      %p86 = scmp.eq.s32.totalorder %s25, 0
      %p87 = por %p85, %p86
      %p88 = scmp.ne.s32.totalorder %s80, %s82
      %p89 = scmp.eq.s32.totalorder %s30, 1
      %p90 = por %p88, %p89
      %p91 = scmp.ne.s32.totalorder %s82, %s83
      %p92 = scmp.eq.s32.totalorder %s30, 0
      %p93 = por %p91, %p92
      %p94 = scmp.ne.s32.totalorder %s82, %s83
      %p95 = scmp.eq.s32.totalorder %s31, 1
      %p96 = por %p94, %p95
      %p98 = scmp.ne.s32.totalorder %s83, %s97
      %p99 = scmp.eq.s32.totalorder %s31, 0
      %p100 = por %p98, %p99
      %s102 = sadd.s32 %s101, 1
      %p105 = scmp.eq.s32.totalorder %s25, 1
      %p106 = scmp.ne.s32.totalorder %s101, %s103
      %p107 = scmp.eq.s32.totalorder %s25, 0
      %p108 = por %p106, %p107
      %p109 = scmp.ne.s32.totalorder %s101, %s103
      %p110 = scmp.eq.s32.totalorder %s30, 1
      %p111 = por %p109, %p110
      %p112 = scmp.ne.s32.totalorder %s103, %s104
      %p113 = scmp.eq.s32.totalorder %s30, 0
      %p114 = por %p112, %p113
      %p115 = scmp.ne.s32.totalorder %s103, %s104
      %p116 = scmp.eq.s32.totalorder %s31, 1
      %p117 = por %p115, %p116
      %p119 = scmp.ne.s32.totalorder %s104, %s118
      %p120 = scmp.eq.s32.totalorder %s31, 0
      %p121 = por %p119, %p120
      %s123 = sadd.s32 %s122, 1
      %p126 = scmp.eq.s32.totalorder %s25, 1
      %p127 = scmp.ne.s32.totalorder %s122, %s124
      %p128 = scmp.eq.s32.totalorder %s25, 0
      %p129 = por %p127, %p128
      %p130 = scmp.ne.s32.totalorder %s122, %s124
      %p131 = scmp.eq.s32.totalorder %s30, 1
      %p132 = por %p130, %p131
      %p133 = scmp.ne.s32.totalorder %s124, %s125
      %p134 = scmp.eq.s32.totalorder %s30, 0
      %p135 = por %p133, %p134
      %p136 = scmp.ne.s32.totalorder %s124, %s125
      %p137 = scmp.eq.s32.totalorder %s31, 1
      %p138 = por %p136, %p137
      %p140 = scmp.ne.s32.totalorder %s125, %s139
      %p141 = scmp.eq.s32.totalorder %s31, 0
      %p142 = por %p140, %p141
      %s144 = sadd.s32 %s143, 1
      %p147 = scmp.eq.s32.totalorder %s25, 1
      %p148 = scmp.ne.s32.totalorder %s143, %s145
      %p149 = scmp.eq.s32.totalorder %s25, 0
      %p150 = por %p148, %p149
      %p151 = scmp.ne.s32.totalorder %s143, %s145
      %p152 = scmp.eq.s32.totalorder %s30, 1
      %p153 = por %p151, %p152
      %p154 = scmp.ne.s32.totalorder %s145, %s146
      %p155 = scmp.eq.s32.totalorder %s30, 0
      %p156 = por %p154, %p155
      %p157 = scmp.ne.s32.totalorder %s145, %s146
      %p158 = scmp.eq.s32.totalorder %s31, 1
      %p159 = por %p157, %p158
      %p161 = scmp.ne.s32.totalorder %s146, %s160
      %p162 = scmp.eq.s32.totalorder %s31, 0
      %p163 = por %p161, %p162
      %s165 = sadd.s32 %s164, 1
      %p168 = scmp.eq.s32.totalorder %s25, 1
      %p169 = scmp.ne.s32.totalorder %s164, %s166
      %p170 = scmp.eq.s32.totalorder %s25, 0
      %p171 = por %p169, %p170
      %p172 = scmp.ne.s32.totalorder %s164, %s166
      %p173 = scmp.eq.s32.totalorder %s30, 1
      %p174 = por %p172, %p173
      %p175 = scmp.ne.s32.totalorder %s166, %s167
      %p176 = scmp.eq.s32.totalorder %s30, 0
      %p177 = por %p175, %p176
      %p178 = scmp.ne.s32.totalorder %s166, %s167
      %p179 = scmp.eq.s32.totalorder %s31, 1
      %p180 = por %p178, %p179
      %p182 = scmp.ne.s32.totalorder %s167, %s181
      %p183 = scmp.eq.s32.totalorder %s31, 0
      %p184 = por %p182, %p183
      %s186 = sadd.s32 %s185, 1
      %p189 = scmp.eq.s32.totalorder %s25, 1
      %p190 = scmp.ne.s32.totalorder %s185, %s187
      %p191 = scmp.eq.s32.totalorder %s25, 0
      %p192 = por %p190, %p191
      %p193 = scmp.ne.s32.totalorder %s185, %s187
      %p194 = scmp.eq.s32.totalorder %s30, 1
      %p195 = por %p193, %p194
      %p196 = scmp.ne.s32.totalorder %s187, %s188
      %p197 = scmp.eq.s32.totalorder %s30, 0
      %p198 = por %p196, %p197
      %p199 = scmp.ne.s32.totalorder %s187, %s188
      %p200 = scmp.eq.s32.totalorder %s31, 1
      %p201 = por %p199, %p200
      %p203 = scmp.ne.s32.totalorder %s188, %s202
      %p204 = scmp.eq.s32.totalorder %s31, 0
      %p205 = por %p203, %p204
      %s207 = sadd.s32 %s206, 1
      %p210 = scmp.eq.s32.totalorder %s25, 1
      %p211 = scmp.ne.s32.totalorder %s206, %s208
      %p212 = scmp.eq.s32.totalorder %s25, 0
      %p213 = por %p211, %p212
      %p214 = scmp.ne.s32.totalorder %s206, %s208
      %p215 = scmp.eq.s32.totalorder %s30, 1
      %p216 = por %p214, %p215
      %p217 = scmp.ne.s32.totalorder %s208, %s209
      %p218 = scmp.eq.s32.totalorder %s30, 0
      %p219 = por %p217, %p218
      %p220 = scmp.ne.s32.totalorder %s208, %s209
      %p221 = scmp.eq.s32.totalorder %s31, 1
      %p222 = por %p220, %p221
      %p224 = scmp.ne.s32.totalorder %s209, %s223
      %p225 = scmp.eq.s32.totalorder %s31, 0
      %p226 = por %p224, %p225
      %s228 = sadd.s32 %s227, 1
      %p231 = scmp.eq.s32.totalorder %s25, 1
      %p232 = scmp.ne.s32.totalorder %s227, %s229
      %p233 = scmp.eq.s32.totalorder %s25, 0
      %p234 = por %p232, %p233
      %p235 = scmp.ne.s32.totalorder %s227, %s229
      %p236 = scmp.eq.s32.totalorder %s30, 1
      %p237 = por %p235, %p236
      %p238 = scmp.ne.s32.totalorder %s229, %s230
      %p239 = scmp.eq.s32.totalorder %s30, 0
      %p240 = por %p238, %p239
      %p241 = scmp.ne.s32.totalorder %s229, %s230
      %p242 = scmp.eq.s32.totalorder %s31, 1
      %p243 = por %p241, %p242
      %p245 = scmp.ne.s32.totalorder %s230, %s244
      %p246 = scmp.eq.s32.totalorder %s31, 0
      %p247 = por %p245, %p246
      %s249 = sadd.s32 %s248, 1
      %p252 = scmp.eq.s32.totalorder %s25, 1
      %p253 = scmp.ne.s32.totalorder %s248, %s250
      %p254 = scmp.eq.s32.totalorder %s25, 0
      %p255 = por %p253, %p254
      %p256 = scmp.ne.s32.totalorder %s248, %s250
      %p257 = scmp.eq.s32.totalorder %s30, 1
      %p258 = por %p256, %p257
      %p259 = scmp.ne.s32.totalorder %s250, %s251
      %p260 = scmp.eq.s32.totalorder %s30, 0
      %p261 = por %p259, %p260
      %p262 = scmp.ne.s32.totalorder %s250, %s251
      %p263 = scmp.eq.s32.totalorder %s31, 1
      %p264 = por %p262, %p263
      %p266 = scmp.ne.s32.totalorder %s251, %s265
      %p267 = scmp.eq.s32.totalorder %s31, 0
      %p268 = por %p266, %p267
      %s270 = sadd.s32 %s269, 1
      %p273 = scmp.eq.s32.totalorder %s25, 1
      %p274 = scmp.ne.s32.totalorder %s269, %s271
      %p275 = scmp.eq.s32.totalorder %s25, 0
      %p276 = por %p274, %p275
      %p277 = scmp.ne.s32.totalorder %s269, %s271
      %p278 = scmp.eq.s32.totalorder %s30, 1
      %p279 = por %p277, %p278
      %p280 = scmp.ne.s32.totalorder %s271, %s272
      %p281 = scmp.eq.s32.totalorder %s30, 0
      %p282 = por %p280, %p281
      %p283 = scmp.ne.s32.totalorder %s271, %s272
      %p284 = scmp.eq.s32.totalorder %s31, 1
      %p285 = por %p283, %p284
      %p287 = scmp.ne.s32.totalorder %s272, %s286
      %p288 = scmp.eq.s32.totalorder %s31, 0
      %p289 = por %p287, %p288
      %s291 = sadd.s32 %s290, 1
      %p294 = scmp.eq.s32.totalorder %s25, 1
      %p295 = scmp.ne.s32.totalorder %s290, %s292
      %p296 = scmp.eq.s32.totalorder %s25, 0
      %p297 = por %p295, %p296
      %p298 = scmp.ne.s32.totalorder %s290, %s292
      %p299 = scmp.eq.s32.totalorder %s30, 1
      %p300 = por %p298, %p299
      %p301 = scmp.ne.s32.totalorder %s292, %s293
      %p302 = scmp.eq.s32.totalorder %s30, 0
      %p303 = por %p301, %p302
      %p304 = scmp.ne.s32.totalorder %s292, %s293
      %p305 = scmp.eq.s32.totalorder %s31, 1
      %p306 = por %p304, %p305
      %p308 = scmp.ne.s32.totalorder %s293, %s307
      %p309 = scmp.eq.s32.totalorder %s31, 0
      %p310 = por %p308, %p309
      %s312 = sadd.s32 %s311, 1
      %p315 = scmp.eq.s32.totalorder %s25, 1
      %p316 = scmp.ne.s32.totalorder %s311, %s313
      %p317 = scmp.eq.s32.totalorder %s25, 0
      %p318 = por %p316, %p317
      %p319 = scmp.ne.s32.totalorder %s311, %s313
      %p320 = scmp.eq.s32.totalorder %s30, 1
      %p321 = por %p319, %p320
      %p322 = scmp.ne.s32.totalorder %s313, %s314
      %p323 = scmp.eq.s32.totalorder %s30, 0
      %p324 = por %p322, %p323
      %p325 = scmp.ne.s32.totalorder %s313, %s314
      %p326 = scmp.eq.s32.totalorder %s31, 1
      %p327 = por %p325, %p326
      %p329 = scmp.ne.s32.totalorder %s314, %s328
      %p330 = scmp.eq.s32.totalorder %s31, 0
      %p331 = por %p329, %p330
      %s333 = sadd.s32 %s332, 1
      %p336 = scmp.eq.s32.totalorder %s25, 1
      %p337 = scmp.ne.s32.totalorder %s332, %s334
      %p338 = scmp.eq.s32.totalorder %s25, 0
      %p339 = por %p337, %p338
      %p340 = scmp.ne.s32.totalorder %s332, %s334
      %p341 = scmp.eq.s32.totalorder %s30, 1
      %p342 = por %p340, %p341
      %p343 = scmp.ne.s32.totalorder %s334, %s335
      %p344 = scmp.eq.s32.totalorder %s30, 0
      %p345 = por %p343, %p344
      %p346 = scmp.ne.s32.totalorder %s334, %s335
      %p347 = scmp.eq.s32.totalorder %s31, 1
      %p348 = por %p346, %p347
      %p350 = scmp.ne.s32.totalorder %s335, %s349
      %p351 = scmp.eq.s32.totalorder %s31, 0
      %p352 = por %p350, %p351
      %s353 = ssub.s32 %s25, %s32
      %p354 = scmp.eq.s32.totalorder %s353, 0
      %s356 = sadd.s32 %s355, 1
      %s357 = scalar_select %p354, %s355, %s356
      %p360 = pneg %p354
      %p361 = scmp.eq.s32.totalorder %s25, 1
      %p362 = por %p360, %p361
      %p363 = scmp.ne.s32.totalorder %s355, %s358
      %p364 = scmp.eq.s32.totalorder %s25, 0
      %p365 = por %p363, %p364
      %p366 = scmp.ne.s32.totalorder %s355, %s358
      %p367 = scmp.eq.s32.totalorder %s30, 1
      %p368 = por %p366, %p367
      %p369 = scmp.ne.s32.totalorder %s358, %s359
      %p370 = scmp.eq.s32.totalorder %s30, 0
      %p371 = por %p369, %p370
      %p372 = scmp.ne.s32.totalorder %s358, %s359
      %p373 = scmp.eq.s32.totalorder %s31, 1
      %p374 = por %p372, %p373
      %p376 = scmp.ne.s32.totalorder %s359, %s375
      %p377 = scmp.eq.s32.totalorder %s31, 0
      %p378 = por %p376, %p377
      %p379 = scmp.le.s32.totalorder 1, %s25
      %p380 = scmp.lt.s32.totalorder %s25, 3
      %p381 = pnand %p379, %p380
      %p382 = pneg %p381
      // Predicated region
      $region9: #{tpu_custom_call.1} parent=5 // pred_check
        _
      $region10: #{tpu_custom_call.1} parent=5 // pred_check_branch
        %384 = sbr.rel (%p381) target = $region12
      $region11: #{tpu_custom_call.1} parent=5 // pred_region
        %s385 = ssub.s32 %s25, 1
        // Predicated region
        $region13: #{tpu_custom_call.1} parent=11 // pred_check
          %p386 = pneg %p72
        $region14: #{tpu_custom_call.1} parent=11 // pred_check_branch
          %388 = sbr.rel (%p386) target = $region16
        $region15: #{tpu_custom_call.1} parent=11 // pred_region
          %390 = vsyncadd [#allocation3], 0
          %s391 = sshll.u32 %s1, 4
          %s392 = int_to_ptr.hbm [resolvable:$true] %s391
          %s393 = sshll.u32 [#allocation2], 4
          %s394 = int_to_ptr.vmem [resolvable:$true] %s393
          %399 = dma.hbm_to_vmem [thread:$0]  %s392, 512, %s394, [#allocation3], 256, 256, 16
        $region16: #{tpu_custom_call.1} parent=11 // pred_fallthru
          _
        // Predicated region
        $region17: #{tpu_custom_call.1} parent=11 // pred_check
          %p400 = pneg %p93
        $region18: #{tpu_custom_call.1} parent=11 // pred_check_branch
          %402 = sbr.rel (%p400) target = $region20
        $region19: #{tpu_custom_call.1} parent=11 // pred_region
          _
        $region20: #{tpu_custom_call.1} parent=11 // pred_fallthru
          _
        // Predicated region
        $region21: #{tpu_custom_call.1} parent=11 // pred_check
          %p403 = pneg %p114
        $region22: #{tpu_custom_call.1} parent=11 // pred_check_branch
          %405 = sbr.rel (%p403) target = $region24
        $region23: #{tpu_custom_call.1} parent=11 // pred_region
          _
        $region24: #{tpu_custom_call.1} parent=11 // pred_fallthru
          _
        // Predicated region
        $region25: #{tpu_custom_call.1} parent=11 // pred_check
          %p406 = pneg %p135
        $region26: #{tpu_custom_call.1} parent=11 // pred_check_branch
          %408 = sbr.rel (%p406) target = $region28
        $region27: #{tpu_custom_call.1} parent=11 // pred_region
          _
        $region28: #{tpu_custom_call.1} parent=11 // pred_fallthru
          _
        // Predicated region
        $region29: #{tpu_custom_call.1} parent=11 // pred_check
          %p409 = pneg %p156
        $region30: #{tpu_custom_call.1} parent=11 // pred_check_branch
          %411 = sbr.rel (%p409) target = $region32
        $region31: #{tpu_custom_call.1} parent=11 // pred_region
          _
        $region32: #{tpu_custom_call.1} parent=11 // pred_fallthru
          _
        // Predicated region
        $region33: #{tpu_custom_call.1} parent=11 // pred_check
          %p412 = pneg %p177
        $region34: #{tpu_custom_call.1} parent=11 // pred_check_branch
          %414 = sbr.rel (%p412) target = $region36
        $region35: #{tpu_custom_call.1} parent=11 // pred_region
          _
        $region36: #{tpu_custom_call.1} parent=11 // pred_fallthru
          _
        // Predicated region
        $region37: #{tpu_custom_call.1} parent=11 // pred_check
          %p415 = pneg %p198
        $region38: #{tpu_custom_call.1} parent=11 // pred_check_branch
          %417 = sbr.rel (%p415) target = $region40
        $region39: #{tpu_custom_call.1} parent=11 // pred_region
          _
        $region40: #{tpu_custom_call.1} parent=11 // pred_fallthru
          _
        // Predicated region
        $region41: #{tpu_custom_call.1} parent=11 // pred_check
          %p418 = pneg %p219
        $region42: #{tpu_custom_call.1} parent=11 // pred_check_branch
          %420 = sbr.rel (%p418) target = $region44
        $region43: #{tpu_custom_call.1} parent=11 // pred_region
          _
        $region44: #{tpu_custom_call.1} parent=11 // pred_fallthru
          _
        // Predicated region
        $region45: #{tpu_custom_call.1} parent=11 // pred_check
          %p421 = pneg %p240
        $region46: #{tpu_custom_call.1} parent=11 // pred_check_branch
          %423 = sbr.rel (%p421) target = $region48
        $region47: #{tpu_custom_call.1} parent=11 // pred_region
          _
        $region48: #{tpu_custom_call.1} parent=11 // pred_fallthru
          _
        // Predicated region
        $region49: #{tpu_custom_call.1} parent=11 // pred_check
          %p424 = pneg %p261
        $region50: #{tpu_custom_call.1} parent=11 // pred_check_branch
          %426 = sbr.rel (%p424) target = $region52
        $region51: #{tpu_custom_call.1} parent=11 // pred_region
          _
        $region52: #{tpu_custom_call.1} parent=11 // pred_fallthru
          _
        // Predicated region
        $region53: #{tpu_custom_call.1} parent=11 // pred_check
          %p427 = pneg %p282
        $region54: #{tpu_custom_call.1} parent=11 // pred_check_branch
          %429 = sbr.rel (%p427) target = $region56
        $region55: #{tpu_custom_call.1} parent=11 // pred_region
          _
        $region56: #{tpu_custom_call.1} parent=11 // pred_fallthru
          _
        // Predicated region
        $region57: #{tpu_custom_call.1} parent=11 // pred_check
          %p430 = pneg %p303
        $region58: #{tpu_custom_call.1} parent=11 // pred_check_branch
          %432 = sbr.rel (%p430) target = $region60
        $region59: #{tpu_custom_call.1} parent=11 // pred_region
          _
        $region60: #{tpu_custom_call.1} parent=11 // pred_fallthru
          _
        // Predicated region
        $region61: #{tpu_custom_call.1} parent=11 // pred_check
          %p433 = pneg %p324
        $region62: #{tpu_custom_call.1} parent=11 // pred_check_branch
          %435 = sbr.rel (%p433) target = $region64
        $region63: #{tpu_custom_call.1} parent=11 // pred_region
          _
        $region64: #{tpu_custom_call.1} parent=11 // pred_fallthru
          _
        // Predicated region
        $region65: #{tpu_custom_call.1} parent=11 // pred_check
          %p436 = pneg %p345
        $region66: #{tpu_custom_call.1} parent=11 // pred_check_branch
          %438 = sbr.rel (%p436) target = $region68
        $region67: #{tpu_custom_call.1} parent=11 // pred_region
          _
        $region68: #{tpu_custom_call.1} parent=11 // pred_fallthru
          _
      $region12: #{tpu_custom_call.1} parent=5 // pred_fallthru
        _
      %p439 = scmp.lt.s32.totalorder %s25, 2
      // Predicated region
      $region69: #{tpu_custom_call.1} parent=5 // pred_check
        %p440 = pneg %p439
      $region70: #{tpu_custom_call.1} parent=5 // pred_check_branch
        %442 = sbr.rel (%p440) target = $region72
      $region71: #{tpu_custom_call.1} parent=5 // pred_region
        // Predicated region
        $region73: #{tpu_custom_call.1} parent=71 // pred_check
          %p443 = pneg %p45
        $region74: #{tpu_custom_call.1} parent=71 // pred_check_branch
          %445 = sbr.rel (%p443) target = $region76
        $region75: #{tpu_custom_call.1} parent=71 // pred_region
          %p446 = scmp.lt.s32.totalorder %s25, 1
          %s447 = scalar_select %p446, %s25, 1
          %s448 = smul.addr %s447, 2
          %s449 = smul.addr %s448, 8
          %s450 = scalar_lea.vmem %s0, %s449
        $region76: #{tpu_custom_call.1} parent=71 // pred_fallthru
          _
      $region72: #{tpu_custom_call.1} parent=5 // pred_fallthru
        _
      %p451 = scmp.le.s32.totalorder 1, %s25
      %p452 = scmp.lt.s32.totalorder %s25, 3
      %p453 = pnand %p451, %p452
      %p454 = pneg %p453
      // Predicated region
      $region77: #{tpu_custom_call.1} parent=5 // pred_check
        _
      $region78: #{tpu_custom_call.1} parent=5 // pred_check_branch
        %456 = sbr.rel (%p453) target = $region80
      $region79: #{tpu_custom_call.1} parent=5 // pred_region
        %s457 = ssub.s32 %s25, 1
        // Predicated region
        $region81: #{tpu_custom_call.1} parent=79 // pred_check
          %p458 = pneg %p72
        $region82: #{tpu_custom_call.1} parent=79 // pred_check_branch
          %460 = sbr.rel (%p458) target = $region84
        $region83: #{tpu_custom_call.1} parent=79 // pred_region
          %462 = dma.done [#allocation3], 512
        $region84: #{tpu_custom_call.1} parent=79 // pred_fallthru
          _
        %p463 = scmp.lt.s32.totalorder %s30, 1
        %s464 = scalar_select %p463, %s30, 1
        %s465 = smul.addr %s464, 2
        %s466 = smul.addr %s465, 8
        %s467 = scalar_lea.vmem %s0, %s466
        %p468 = pneg %p51
        %p469 = pneg %p48
        %p470 = pneg %p72
        %p471 = pneg %p69
        %p472 = pneg %p93
        %p473 = pneg %p90
        %p474 = pneg %p114
        %p475 = pneg %p111
        %p476 = pneg %p135
        %p477 = pneg %p132
        %p478 = pneg %p156
        %p479 = pneg %p153
        %p480 = pneg %p177
        %p481 = pneg %p174
        %p482 = pneg %p198
        %p483 = pneg %p195
        %p484 = pneg %p219
        %p485 = pneg %p216
        %p486 = pneg %p240
        %p487 = pneg %p237
        %p488 = pneg %p261
        %p489 = pneg %p258
        %p490 = pneg %p282
        %p491 = pneg %p279
        %p492 = pneg %p303
        %p493 = pneg %p300
        %p494 = pneg %p324
        %p495 = pneg %p321
        %p496 = pneg %p345
        %p497 = pneg %p342
        %p498 = pneg %p371
        %p499 = pneg %p368
        %s500 = sand.u32 %s358, 1
        %s501 = scalar_lea.sflag [#allocation4], %s500
        %s502 = sand.u32 %s358, 1
        %s503 = smul.addr %s502, 16
        %s504 = scalar_lea.vmem [#allocation5], %s503
        %p505 = scmp.lt.s32.totalorder %s30, 1
        %s506 = scalar_select %p505, %s30, 1
        %s507 = smul.addr %s506, 2
        %s508 = smul.addr %s507, 8
        %s509 = scalar_lea.vmem %s0, %s508
        %v511 = vld [vmem:[%s509] sm:$0xff]
        %v512 = vld [vmem:[%s509 + $0x8] sm:$0xff]
        %v513 = vld [vmem:[#allocation2] sm:$0xff]
        %v514 = vld [vmem:[#allocation2 + $0x8] sm:$0xff]
        %v515 = vld [vmem:[#allocation2 + $0x10] sm:$0x1]
        %v516 = vld [vmem:[#allocation2 + $0x18] sm:$0x1]
        %v517 = vld [vmem:[%s2] sm:$0xf]
        %v518 = vpack.c.bf16 %v511, %v511
        %v519 = vpack.c.bf16 %v512, %v512
        %v520 = vld [vmem:[%s3] sm:$0xff]
        %522 = vset.pattern.permute.xlu0 0
        %523 = vperm.xlu0 %522, %v520
        %v524 = vpop.permute.xlu0 %523
        %vm526 = vcmask 64512
        %v528 = vsel %vm526, %v517, 0
        %vm530 = vcmask 1043456
        %v532 = vsel %vm530, %v518, 0
        %v535 = vsel %vm530, %v519, 0
        %537 = vmatpush.bf16.msra.mxu0 0
        %538 = vmatpush.bf16.msra.mxu0 0
        %539 = vmatpush.bf16.msra.mxu0 0
        %540 = vmatpush.bf16.msra.mxu0 0
        %541 = vmatpush.bf16.msra.mxu0 0
        %542 = vmatpush.bf16.msra.mxu0 0
        %543 = vmatpush.bf16.msra.mxu0 0
        %544 = vmatpush.bf16.msra.mxu0 %v532
        %545 = vmatmul.bf16.gmra.mxu0 %v528
        %v546 = vpop.f32.mrf.mxu0
        %v547 = vadd.f32 %v524, %v546
        %v548 = vpop.f32.mrf.mxu0
        %549 = vdwg.mxu0
        %550 = vmatpush.bf16.msra.mxu0 0
        %551 = vmatpush.bf16.msra.mxu0 0
        %552 = vmatpush.bf16.msra.mxu0 0
        %553 = vmatpush.bf16.msra.mxu0 0
        %554 = vmatpush.bf16.msra.mxu0 0
        %555 = vmatpush.bf16.msra.mxu0 0
        %556 = vmatpush.bf16.msra.mxu0 0
        %557 = vmatpush.bf16.msra.mxu0 %v535
        %558 = vmatmul.bf16.gmra.mxu0 %v528
        %v559 = vpop.f32.mrf.mxu0
        %v560 = vadd.f32 %v524, %v559
        %v561 = vpop.f32.mrf.mxu0
        %562 = vdwg.mxu0
        %v563 = vmin.f32 %v547, 20.0
        %v564 = vmin.f32 %v560, 20.0
        %v565 = vmul.f32 %v563, 1.442695
        %v566 = vpow.pop %v565
        %v567 = vmul.f32 %v564, 1.442695
        %v568 = vpow.pop %v567
        %v569 = vadd.f32 %v566, 2.0
        %v570 = vadd.f32 %v568, 2.0
        %v571 = vmul.f32 %v566, %v569
        %v572 = vmul.f32 %v568, %v570
        %v573 = vmul.f32 %v547, %v571
        %v574 = vmul.f32 %v560, %v572
        %v575 = vadd.f32 %v571, 2.0
        %v576 = vadd.f32 %v572, 2.0
        %v577 = vrcp.pop %v575
        %v578 = vrcp.pop %v576
        %v579 = vmul.f32 %v573, %v577
        %v580 = vmul.f32 %v574, %v578
        %v581 = vld [vmem:[%s4] sm:$0xf]
        %v582 = vpack.c.bf16 %v579, %v579
        %v583 = vpack.c.bf16 %v580, %v580
        %v584 = vld [vmem:[%s5] sm:$0xff]
        %586 = vset.pattern.permute.xlu0 0
        %587 = vperm.xlu0 %586, %v584
        %v588 = vpop.permute.xlu0 %587
        %v591 = vsel %vm526, %v581, 0
        %v594 = vsel %vm530, %v582, 0
        %v597 = vsel %vm530, %v583, 0
        %599 = vmatpush.bf16.msra.mxu0 0
        %600 = vmatpush.bf16.msra.mxu0 0
        %601 = vmatpush.bf16.msra.mxu0 0
        %602 = vmatpush.bf16.msra.mxu0 0
        %603 = vmatpush.bf16.msra.mxu0 0
        %604 = vmatpush.bf16.msra.mxu0 0
        %605 = vmatpush.bf16.msra.mxu0 0
        %606 = vmatpush.bf16.msra.mxu0 %v594
        %607 = vmatmul.bf16.gmra.mxu0 %v591
        %v608 = vpop.f32.mrf.mxu0
        %v609 = vadd.f32 %v588, %v608
        %v610 = vpop.f32.mrf.mxu0
        %611 = vdwg.mxu0
        %612 = vmatpush.bf16.msra.mxu0 0
        %613 = vmatpush.bf16.msra.mxu0 0
        %614 = vmatpush.bf16.msra.mxu0 0
        %615 = vmatpush.bf16.msra.mxu0 0
        %616 = vmatpush.bf16.msra.mxu0 0
        %617 = vmatpush.bf16.msra.mxu0 0
        %618 = vmatpush.bf16.msra.mxu0 0
        %619 = vmatpush.bf16.msra.mxu0 %v597
        %620 = vmatmul.bf16.gmra.mxu0 %v591
        %v621 = vpop.f32.mrf.mxu0
        %v622 = vadd.f32 %v588, %v621
        %v623 = vpop.f32.mrf.mxu0
        %624 = vdwg.mxu0
        %v625 = vmin.f32 %v609, 20.0
        %v626 = vmin.f32 %v622, 20.0
        %v627 = vmul.f32 %v625, 1.442695
        %v628 = vpow.pop %v627
        %v629 = vmul.f32 %v626, 1.442695
        %v630 = vpow.pop %v629
        %v631 = vadd.f32 %v628, 2.0
        %v632 = vadd.f32 %v630, 2.0
        %v633 = vmul.f32 %v628, %v631
        %v634 = vmul.f32 %v630, %v632
        %v635 = vmul.f32 %v609, %v633
        %v636 = vmul.f32 %v622, %v634
        %v637 = vadd.f32 %v633, 2.0
        %v638 = vadd.f32 %v634, 2.0
        %v639 = vrcp.pop %v637
        %v640 = vrcp.pop %v638
        %v641 = vmul.f32 %v635, %v639
        %v642 = vmul.f32 %v636, %v640
        %643 = vrot.lane.b32.xlu0 %v641, 17
        %v644 = vpop.permute.xlu0 %643
        %645 = vrot.lane.b32.xlu0 %v642, 17
        %v646 = vpop.permute.xlu0 %645
        %v647 = vlaneseq
        %v648 = vand.u32 %v647, 127
        %vm649 = vcmp.lt.s32.totalorder %v648, 17
        %v650 = vsel %vm649, %v644, %v646
        %v651 = vsel %vm649, %v646, %v644
        %v652 = vperm.slane %v513, 0
        %v653 = vperm.slane %v514, 0
        %v654 = vmul.f32 %v651, %v652
        %v655 = vmul.f32 %v650, %v653
        %656 = vrot.lane.b32.xlu0 %v641, 16
        %v657 = vpop.permute.xlu0 %656
        %658 = vrot.lane.b32.xlu0 %v642, 16
        %v659 = vpop.permute.xlu0 %658
        %vm660 = vcmp.lt.s32.totalorder %v648, 16
        %v661 = vsel %vm660, %v657, %v659
        %v662 = vsel %vm660, %v659, %v657
        %v663 = vperm.slane %v513, 1
        %v664 = vperm.slane %v514, 1
        %v665 = vmul.f32 %v662, %v663
        %v666 = vmul.f32 %v661, %v664
        %667 = vrot.lane.b32.xlu0 %v641, 15
        %v668 = vpop.permute.xlu0 %667
        %669 = vrot.lane.b32.xlu0 %v642, 15
        %v670 = vpop.permute.xlu0 %669
        %vm671 = vcmp.lt.s32.totalorder %v648, 15
        %v672 = vsel %vm671, %v668, %v670
        %v673 = vsel %vm671, %v670, %v668
        %v674 = vperm.slane %v513, 2
        %v675 = vperm.slane %v514, 2
        %v676 = vmul.f32 %v673, %v674
        %v677 = vmul.f32 %v672, %v675
        %678 = vrot.lane.b32.xlu0 %v641, 1
        %v679 = vpop.permute.xlu0 %678
        %680 = vrot.lane.b32.xlu0 %v642, 1
        %v681 = vpop.permute.xlu0 %680
        %vm682 = vcmp.lt.s32.totalorder %v648, 1
        %v683 = vsel %vm682, %v679, %v681
        %v684 = vsel %vm682, %v681, %v679
        %v685 = vperm.slane %v513, 3
        %v686 = vperm.slane %v514, 3
        %v687 = vmul.f32 %v684, %v685
        %v688 = vmul.f32 %v683, %v686
        %689 = vrot.lane.b32.xlu0 %v641, 127
        %v690 = vpop.permute.xlu0 %689
        %691 = vrot.lane.b32.xlu0 %v642, 127
        %v692 = vpop.permute.xlu0 %691
        %vm693 = vcmp.lt.s32.totalorder %v648, 127
        %v694 = vsel %vm693, %v690, %v692
        %v695 = vsel %vm693, %v692, %v690
        %v696 = vperm.slane %v513, 5
        %v697 = vperm.slane %v514, 5
        %v698 = vmul.f32 %v694, %v696
        %v699 = vmul.f32 %v695, %v697
        %700 = vrot.lane.b32.xlu0 %v641, 113
        %v701 = vpop.permute.xlu0 %700
        %702 = vrot.lane.b32.xlu0 %v642, 113
        %v703 = vpop.permute.xlu0 %702
        %vm704 = vcmp.lt.s32.totalorder %v648, 113
        %v705 = vsel %vm704, %v701, %v703
        %v706 = vsel %vm704, %v703, %v701
        %v707 = vperm.slane %v513, 6
        %v708 = vperm.slane %v514, 6
        %v709 = vmul.f32 %v705, %v707
        %v710 = vmul.f32 %v706, %v708
        %711 = vrot.lane.b32.xlu0 %v641, 112
        %v712 = vpop.permute.xlu0 %711
        %713 = vrot.lane.b32.xlu0 %v642, 112
        %v714 = vpop.permute.xlu0 %713
        %vm715 = vcmp.lt.s32.totalorder %v648, 112
        %v716 = vsel %vm715, %v712, %v714
        %v717 = vsel %vm715, %v714, %v712
        %v718 = vperm.slane %v513, 7
        %v719 = vperm.slane %v514, 7
        %v720 = vmul.f32 %v716, %v718
        %v721 = vmul.f32 %v717, %v719
        %722 = vrot.lane.b32.xlu0 %v641, 111
        %v723 = vpop.permute.xlu0 %722
        %724 = vrot.lane.b32.xlu0 %v642, 111
        %v725 = vpop.permute.xlu0 %724
        %vm726 = vcmp.lt.s32.totalorder %v648, 111
        %v727 = vsel %vm726, %v723, %v725
        %v728 = vsel %vm726, %v725, %v723
        %v729 = vperm.slane %v515, 0
        %v730 = vperm.slane %v516, 0
        %v731 = vmul.f32 %v727, %v729
        %v732 = vmul.f32 %v728, %v730
        %v733 = vld [vmem:[%s6] sm:$0xf]
        %v734 = vpack.c.bf16 %v665, %v654
        %v735 = vpack.c.bf16 %v666, %v655
        %v736 = vpack.c.bf16 %v687, %v676
        %v737 = vpack.c.bf16 %v688, %v677
        %v738 = vpack.c.bf16 %v698, %v641
        %v739 = vpack.c.bf16 %v699, %v642
        %v740 = vpack.c.bf16 %v720, %v709
        %v741 = vpack.c.bf16 %v721, %v710
        %v742 = vpack.c.bf16 %v731, %v731
        %v743 = vpack.c.bf16 %v732, %v732
        %v744 = vld [vmem:[%s7] sm:$0xff]
        %746 = vset.pattern.permute.xlu0 0
        %747 = vperm.xlu0 %746, %v744
        %v748 = vpop.permute.xlu0 %747
        %vm750 = vcmask 588800
        %v752 = vsel %vm750, %v733, 0
        %v755 = vsel %vm530, %v742, 0
        %v758 = vsel %vm530, %v743, 0
        %760 = vmatpush.bf16.msra.mxu0 0
        %761 = vmatpush.bf16.msra.mxu0 0
        %762 = vmatpush.bf16.msra.mxu0 0
        %763 = vmatpush.bf16.msra.mxu0 %v755
        %764 = vmatpush.bf16.msra.mxu0 %v740
        %765 = vmatpush.bf16.msra.mxu0 %v738
        %766 = vmatpush.bf16.msra.mxu0 %v736
        %767 = vmatpush.bf16.msra.mxu0 %v734
        %768 = vmatmul.bf16.gmra.mxu0 %v752
        %v769 = vpop.f32.mrf.mxu0
        %v770 = vadd.f32 %v748, %v769
        %v771 = vpop.f32.mrf.mxu0
        %772 = vdwg.mxu0
        %773 = vmatpush.bf16.msra.mxu0 0
        %774 = vmatpush.bf16.msra.mxu0 0
        %775 = vmatpush.bf16.msra.mxu0 0
        %776 = vmatpush.bf16.msra.mxu0 %v758
        %777 = vmatpush.bf16.msra.mxu0 %v741
        %778 = vmatpush.bf16.msra.mxu0 %v739
        %779 = vmatpush.bf16.msra.mxu0 %v737
        %780 = vmatpush.bf16.msra.mxu0 %v735
        %781 = vmatmul.bf16.gmra.mxu0 %v752
        %v782 = vpop.f32.mrf.mxu0
        %v783 = vadd.f32 %v748, %v782
        %v784 = vpop.f32.mrf.mxu0
        %785 = vdwg.mxu0
        %v786 = vmin.f32 %v770, 20.0
        %v787 = vmin.f32 %v783, 20.0
        %v788 = vmul.f32 %v786, 1.442695
        %v789 = vpow.pop %v788
        %v790 = vmul.f32 %v787, 1.442695
        %v791 = vpow.pop %v790
        %v792 = vadd.f32 %v789, 2.0
        %v793 = vadd.f32 %v791, 2.0
        %v794 = vmul.f32 %v789, %v792
        %v795 = vmul.f32 %v791, %v793
        %v796 = vmul.f32 %v770, %v794
        %v797 = vmul.f32 %v783, %v795
        %v798 = vadd.f32 %v794, 2.0
        %v799 = vadd.f32 %v795, 2.0
        %v800 = vrcp.pop %v798
        %v801 = vrcp.pop %v799
        %v802 = vmul.f32 %v796, %v800
        %v803 = vmul.f32 %v797, %v801
        %s804 = scalar_lea.vmem %s4, 4
        %v805 = vld [vmem:[%s804] sm:$0xf]
        %v806 = vpack.c.bf16 %v802, %v802
        %v807 = vpack.c.bf16 %v803, %v803
        %s808 = scalar_lea.vmem %s5, 8
        %v809 = vld [vmem:[%s808] sm:$0xff]
        %811 = vset.pattern.permute.xlu0 0
        %812 = vperm.xlu0 %811, %v809
        %v813 = vpop.permute.xlu0 %812
        %v816 = vsel %vm526, %v805, 0
        %v819 = vsel %vm530, %v806, 0
        %v822 = vsel %vm530, %v807, 0
        %824 = vmatpush.bf16.msra.mxu0 0
        %825 = vmatpush.bf16.msra.mxu0 0
        %826 = vmatpush.bf16.msra.mxu0 0
        %827 = vmatpush.bf16.msra.mxu0 0
        %828 = vmatpush.bf16.msra.mxu0 0
        %829 = vmatpush.bf16.msra.mxu0 0
        %830 = vmatpush.bf16.msra.mxu0 0
        %831 = vmatpush.bf16.msra.mxu0 %v819
        %832 = vmatmul.bf16.gmra.mxu0 %v816
        %v833 = vpop.f32.mrf.mxu0
        %v834 = vadd.f32 %v813, %v833
        %v835 = vpop.f32.mrf.mxu0
        %836 = vdwg.mxu0
        %837 = vmatpush.bf16.msra.mxu0 0
        %838 = vmatpush.bf16.msra.mxu0 0
        %839 = vmatpush.bf16.msra.mxu0 0
        %840 = vmatpush.bf16.msra.mxu0 0
        %841 = vmatpush.bf16.msra.mxu0 0
        %842 = vmatpush.bf16.msra.mxu0 0
        %843 = vmatpush.bf16.msra.mxu0 0
        %844 = vmatpush.bf16.msra.mxu0 %v822
        %845 = vmatmul.bf16.gmra.mxu0 %v816
        %v846 = vpop.f32.mrf.mxu0
        %v847 = vadd.f32 %v813, %v846
        %v848 = vpop.f32.mrf.mxu0
        %849 = vdwg.mxu0
        %v850 = vmin.f32 %v834, 20.0
        %v851 = vmin.f32 %v847, 20.0
        %v852 = vmul.f32 %v850, 1.442695
        %v853 = vpow.pop %v852
        %v854 = vmul.f32 %v851, 1.442695
        %v855 = vpow.pop %v854
        %v856 = vadd.f32 %v853, 2.0
        %v857 = vadd.f32 %v855, 2.0
        %v858 = vmul.f32 %v853, %v856
        %v859 = vmul.f32 %v855, %v857
        %v860 = vmul.f32 %v834, %v858
        %v861 = vmul.f32 %v847, %v859
        %v862 = vadd.f32 %v858, 2.0
        %v863 = vadd.f32 %v859, 2.0
        %v864 = vrcp.pop %v862
        %v865 = vrcp.pop %v863
        %v866 = vmul.f32 %v860, %v864
        %v867 = vmul.f32 %v861, %v865
        %868 = vrot.lane.b32.xlu0 %v866, 17
        %v869 = vpop.permute.xlu0 %868
        %870 = vrot.lane.b32.xlu0 %v867, 17
        %v871 = vpop.permute.xlu0 %870
        %v872 = vsel %vm649, %v869, %v871
        %v873 = vsel %vm649, %v871, %v869
        %v874 = vmul.f32 %v873, %v652
        %v875 = vmul.f32 %v872, %v653
        %876 = vrot.lane.b32.xlu0 %v866, 16
        %v877 = vpop.permute.xlu0 %876
        %878 = vrot.lane.b32.xlu0 %v867, 16
        %v879 = vpop.permute.xlu0 %878
        %v880 = vsel %vm660, %v877, %v879
        %v881 = vsel %vm660, %v879, %v877
        %v882 = vmul.f32 %v881, %v663
        %v883 = vmul.f32 %v880, %v664
        %884 = vrot.lane.b32.xlu0 %v866, 15
        %v885 = vpop.permute.xlu0 %884
        %886 = vrot.lane.b32.xlu0 %v867, 15
        %v887 = vpop.permute.xlu0 %886
        %v888 = vsel %vm671, %v885, %v887
        %v889 = vsel %vm671, %v887, %v885
        %v890 = vmul.f32 %v889, %v674
        %v891 = vmul.f32 %v888, %v675
        %892 = vrot.lane.b32.xlu0 %v866, 1
        %v893 = vpop.permute.xlu0 %892
        %894 = vrot.lane.b32.xlu0 %v867, 1
        %v895 = vpop.permute.xlu0 %894
        %v896 = vsel %vm682, %v893, %v895
        %v897 = vsel %vm682, %v895, %v893
        %v898 = vmul.f32 %v897, %v685
        %v899 = vmul.f32 %v896, %v686
        %900 = vrot.lane.b32.xlu0 %v866, 127
        %v901 = vpop.permute.xlu0 %900
        %902 = vrot.lane.b32.xlu0 %v867, 127
        %v903 = vpop.permute.xlu0 %902
        %v904 = vsel %vm693, %v901, %v903
        %v905 = vsel %vm693, %v903, %v901
        %v906 = vmul.f32 %v904, %v696
        %v907 = vmul.f32 %v905, %v697
        %908 = vrot.lane.b32.xlu0 %v866, 113
        %v909 = vpop.permute.xlu0 %908
        %910 = vrot.lane.b32.xlu0 %v867, 113
        %v911 = vpop.permute.xlu0 %910
        %v912 = vsel %vm704, %v909, %v911
        %v913 = vsel %vm704, %v911, %v909
        %v914 = vmul.f32 %v912, %v707
        %v915 = vmul.f32 %v913, %v708
        %916 = vrot.lane.b32.xlu0 %v866, 112
        %v917 = vpop.permute.xlu0 %916
        %918 = vrot.lane.b32.xlu0 %v867, 112
        %v919 = vpop.permute.xlu0 %918
        %v920 = vsel %vm715, %v917, %v919
        %v921 = vsel %vm715, %v919, %v917
        %v922 = vmul.f32 %v920, %v718
        %v923 = vmul.f32 %v921, %v719
        %924 = vrot.lane.b32.xlu0 %v866, 111
        %v925 = vpop.permute.xlu0 %924
        %926 = vrot.lane.b32.xlu0 %v867, 111
        %v927 = vpop.permute.xlu0 %926
        %v928 = vsel %vm726, %v925, %v927
        %v929 = vsel %vm726, %v927, %v925
        %v930 = vmul.f32 %v928, %v729
        %v931 = vmul.f32 %v929, %v730
        %s932 = scalar_lea.vmem %s6, 4
        %v933 = vld [vmem:[%s932] sm:$0xf]
        %v934 = vpack.c.bf16 %v882, %v874
        %v935 = vpack.c.bf16 %v883, %v875
        %v936 = vpack.c.bf16 %v898, %v890
        %v937 = vpack.c.bf16 %v899, %v891
        %v938 = vpack.c.bf16 %v906, %v866
        %v939 = vpack.c.bf16 %v907, %v867
        %v940 = vpack.c.bf16 %v922, %v914
        %v941 = vpack.c.bf16 %v923, %v915
        %v942 = vpack.c.bf16 %v930, %v930
        %v943 = vpack.c.bf16 %v931, %v931
        %s944 = scalar_lea.vmem %s7, 8
        %v945 = vld [vmem:[%s944] sm:$0xff]
        %947 = vset.pattern.permute.xlu0 0
        %948 = vperm.xlu0 %947, %v945
        %v949 = vpop.permute.xlu0 %948
        %v952 = vsel %vm750, %v933, 0
        %v955 = vsel %vm530, %v942, 0
        %v958 = vsel %vm530, %v943, 0
        %960 = vmatpush.bf16.msra.mxu0 0
        %961 = vmatpush.bf16.msra.mxu0 0
        %962 = vmatpush.bf16.msra.mxu0 0
        %963 = vmatpush.bf16.msra.mxu0 %v955
        %964 = vmatpush.bf16.msra.mxu0 %v940
        %965 = vmatpush.bf16.msra.mxu0 %v938
        %966 = vmatpush.bf16.msra.mxu0 %v936
        %967 = vmatpush.bf16.msra.mxu0 %v934
        %968 = vmatmul.bf16.gmra.mxu0 %v952
        %v969 = vpop.f32.mrf.mxu0
        %v970 = vadd.f32 %v949, %v969
        %v971 = vpop.f32.mrf.mxu0
        %972 = vdwg.mxu0
        %973 = vmatpush.bf16.msra.mxu0 0
        %974 = vmatpush.bf16.msra.mxu0 0
        %975 = vmatpush.bf16.msra.mxu0 0
        %976 = vmatpush.bf16.msra.mxu0 %v958
        %977 = vmatpush.bf16.msra.mxu0 %v941
        %978 = vmatpush.bf16.msra.mxu0 %v939
        %979 = vmatpush.bf16.msra.mxu0 %v937
        %980 = vmatpush.bf16.msra.mxu0 %v935
        %981 = vmatmul.bf16.gmra.mxu0 %v952
        %v982 = vpop.f32.mrf.mxu0
        %v983 = vadd.f32 %v949, %v982
        %v984 = vpop.f32.mrf.mxu0
        %985 = vdwg.mxu0
        %v986 = vmin.f32 %v970, 20.0
        %v987 = vmin.f32 %v983, 20.0
        %v988 = vmul.f32 %v986, 1.442695
        %v989 = vpow.pop %v988
        %v990 = vmul.f32 %v987, 1.442695
        %v991 = vpow.pop %v990
        %v992 = vadd.f32 %v989, 2.0
        %v993 = vadd.f32 %v991, 2.0
        %v994 = vmul.f32 %v989, %v992
        %v995 = vmul.f32 %v991, %v993
        %v996 = vmul.f32 %v970, %v994
        %v997 = vmul.f32 %v983, %v995
        %v998 = vadd.f32 %v994, 2.0
        %v999 = vadd.f32 %v995, 2.0
        %v1000 = vrcp.pop %v998
        %v1001 = vrcp.pop %v999
        %v1002 = vmul.f32 %v996, %v1000
        %v1003 = vmul.f32 %v997, %v1001
        %v1004 = vld [vmem:[%s10] sm:$0xff]
        %1006 = vset.pattern.permute.xlu0 0
        %1007 = vperm.xlu0 %1006, %v1004
        %v1008 = vpop.permute.xlu0 %1007
        %v1010 = vmul.f32 %v1008, %v1002
        %v1011 = vmul.f32 %v1008, %v1003
        %v1012 = vld [vmem:[%s11] sm:$0xff]
        %1014 = vset.pattern.permute.xlu0 0
        %1015 = vperm.xlu0 %1014, %v1012
        %v1016 = vpop.permute.xlu0 %1015
        %v1018 = vadd.f32 %v1010, %v1016
        %v1019 = vadd.f32 %v1011, %v1016
        %v1020 = vmin.f32 %v1018, 20.0
        %v1021 = vmin.f32 %v1019, 20.0
        %v1022 = vmul.f32 %v1020, 1.442695
        %v1023 = vpow.pop %v1022
        %v1024 = vmul.f32 %v1021, 1.442695
        %v1025 = vpow.pop %v1024
        %v1026 = vadd.f32 %v1023, 2.0
        %v1027 = vadd.f32 %v1025, 2.0
        %v1028 = vmul.f32 %v1023, %v1026
        %v1029 = vmul.f32 %v1025, %v1027
        %v1030 = vmul.f32 %v1018, %v1028
        %v1031 = vmul.f32 %v1019, %v1029
        %v1032 = vadd.f32 %v1028, 2.0
        %v1033 = vadd.f32 %v1029, 2.0
        %v1034 = vrcp.pop %v1032
        %v1035 = vrcp.pop %v1033
        %v1036 = vmul.f32 %v1030, %v1034
        %v1037 = vmul.f32 %v1031, %v1035
        %v1038 = vld [vmem:[%s8] sm:$0xf]
        %v1039 = vld [vmem:[%s9] sm:$0xff]
        %1041 = vset.pattern.permute.xlu0 0
        %1042 = vperm.xlu0 %1041, %v1039
        %v1043 = vpop.permute.xlu0 %1042
        %v1046 = vsel %vm526, %v1038, 0
        %1048 = vmatpush.bf16.msra.mxu0 0
        %1049 = vmatpush.bf16.msra.mxu0 0
        %1050 = vmatpush.bf16.msra.mxu0 0
        %1051 = vmatpush.bf16.msra.mxu0 0
        %1052 = vmatpush.bf16.msra.mxu0 0
        %1053 = vmatpush.bf16.msra.mxu0 0
        %1054 = vmatpush.bf16.msra.mxu0 0
        %1055 = vmatpush.bf16.msra.mxu0 %v594
        %1056 = vmatmul.bf16.gmra.mxu0 %v1046
        %v1057 = vpop.f32.mrf.mxu0
        %v1058 = vadd.f32 %v1043, %v1057
        %v1059 = vpop.f32.mrf.mxu0
        %1060 = vdwg.mxu0
        %1061 = vmatpush.bf16.msra.mxu0 0
        %1062 = vmatpush.bf16.msra.mxu0 0
        %1063 = vmatpush.bf16.msra.mxu0 0
        %1064 = vmatpush.bf16.msra.mxu0 0
        %1065 = vmatpush.bf16.msra.mxu0 0
        %1066 = vmatpush.bf16.msra.mxu0 0
        %1067 = vmatpush.bf16.msra.mxu0 0
        %1068 = vmatpush.bf16.msra.mxu0 %v597
        %1069 = vmatmul.bf16.gmra.mxu0 %v1046
        %v1070 = vpop.f32.mrf.mxu0
        %v1071 = vadd.f32 %v1043, %v1070
        %v1072 = vpop.f32.mrf.mxu0
        %1073 = vdwg.mxu0
        %v1074 = vmin.f32 %v1058, 20.0
        %v1075 = vmin.f32 %v1071, 20.0
        %v1076 = vmul.f32 %v1074, 1.442695
        %v1077 = vpow.pop %v1076
        %v1078 = vmul.f32 %v1075, 1.442695
        %v1079 = vpow.pop %v1078
        %v1080 = vadd.f32 %v1077, 2.0
        %v1081 = vadd.f32 %v1079, 2.0
        %v1082 = vmul.f32 %v1077, %v1080
        %v1083 = vmul.f32 %v1079, %v1081
        %v1084 = vmul.f32 %v1058, %v1082
        %v1085 = vmul.f32 %v1071, %v1083
        %v1086 = vadd.f32 %v1082, 2.0
        %v1087 = vadd.f32 %v1083, 2.0
        %v1088 = vrcp.pop %v1086
        %v1089 = vrcp.pop %v1087
        %v1090 = vmul.f32 %v1084, %v1088
        %v1091 = vmul.f32 %v1085, %v1089
        %v1092 = vld [vmem:[%s12] sm:$0xf]
        %v1093 = vpack.c.bf16 %v1036, %v1036
        %v1094 = vpack.c.bf16 %v1037, %v1037
        %v1095 = vld [vmem:[%s13] sm:$0xf]
        %v1096 = vpack.c.bf16 %v1090, %v1090
        %v1097 = vpack.c.bf16 %v1091, %v1091
        %v1099 = vsel %vm526, %v1095, 0
        %v1102 = vsel %vm530, %v1096, 0
        %v1105 = vsel %vm530, %v1097, 0
        %1107 = vmatpush.bf16.msra.mxu0 0
        %1108 = vmatpush.bf16.msra.mxu0 0
        %1109 = vmatpush.bf16.msra.mxu0 0
        %1110 = vmatpush.bf16.msra.mxu0 0
        %1111 = vmatpush.bf16.msra.mxu0 0
        %1112 = vmatpush.bf16.msra.mxu0 0
        %1113 = vmatpush.bf16.msra.mxu0 0
        %1114 = vmatpush.bf16.msra.mxu0 %v1102
        %1115 = vmatmul.bf16.gmra.mxu0 %v1099
        %v1116 = vpop.f32.mrf.mxu0
        %v1117 = vadd.f32 0.0, %v1116
        %v1118 = vpop.f32.mrf.mxu0
        %1119 = vdwg.mxu0
        %1120 = vmatpush.bf16.msra.mxu0 0
        %1121 = vmatpush.bf16.msra.mxu0 0
        %1122 = vmatpush.bf16.msra.mxu0 0
        %1123 = vmatpush.bf16.msra.mxu0 0
        %1124 = vmatpush.bf16.msra.mxu0 0
        %1125 = vmatpush.bf16.msra.mxu0 0
        %1126 = vmatpush.bf16.msra.mxu0 0
        %1127 = vmatpush.bf16.msra.mxu0 %v1105
        %1128 = vmatmul.bf16.gmra.mxu0 %v1099
        %v1129 = vpop.f32.mrf.mxu0
        %v1130 = vadd.f32 0.0, %v1129
        %v1131 = vpop.f32.mrf.mxu0
        %1132 = vdwg.mxu0
        %v1134 = vsel %vm526, %v1092, 0
        %v1137 = vsel %vm530, %v1093, 0
        %v1140 = vsel %vm530, %v1094, 0
        %1142 = vmatpush.bf16.msra.mxu0 0
        %1143 = vmatpush.bf16.msra.mxu0 0
        %1144 = vmatpush.bf16.msra.mxu0 0
        %1145 = vmatpush.bf16.msra.mxu0 0
        %1146 = vmatpush.bf16.msra.mxu0 0
        %1147 = vmatpush.bf16.msra.mxu0 0
        %1148 = vmatpush.bf16.msra.mxu0 0
        %1149 = vmatpush.bf16.msra.mxu0 %v1137
        %1150 = vmatmul.bf16.gmra.mxu0 %v1134
        %v1151 = vpop.f32.mrf.mxu0
        %v1152 = vadd.f32 %v1117, %v1151
        %v1153 = vpop.f32.mrf.mxu0
        %1154 = vdwg.mxu0
        %1155 = vmatpush.bf16.msra.mxu0 0
        %1156 = vmatpush.bf16.msra.mxu0 0
        %1157 = vmatpush.bf16.msra.mxu0 0
        %1158 = vmatpush.bf16.msra.mxu0 0
        %1159 = vmatpush.bf16.msra.mxu0 0
        %1160 = vmatpush.bf16.msra.mxu0 0
        %1161 = vmatpush.bf16.msra.mxu0 0
        %1162 = vmatpush.bf16.msra.mxu0 %v1140
        %1163 = vmatmul.bf16.gmra.mxu0 %v1134
        %v1164 = vpop.f32.mrf.mxu0
        %v1165 = vadd.f32 %v1130, %v1164
        %v1166 = vpop.f32.mrf.mxu0
        %1167 = vdwg.mxu0
        %v1168 = vld [vmem:[%s14] sm:$0xff]
        %1170 = vset.pattern.permute.xlu0 0
        %1171 = vperm.xlu0 %1170, %v1168
        %v1172 = vpop.permute.xlu0 %1171
        %v1174 = vadd.f32 %v1152, %v1172
        %v1175 = vadd.f32 %v1165, %v1172
        %v1176 = vmin.f32 %v1174, 20.0
        %v1177 = vmin.f32 %v1175, 20.0
        %v1178 = vmul.f32 %v1176, 1.442695
        %v1179 = vpow.pop %v1178
        %v1180 = vmul.f32 %v1177, 1.442695
        %v1181 = vpow.pop %v1180
        %v1182 = vadd.f32 %v1179, 2.0
        %v1183 = vadd.f32 %v1181, 2.0
        %v1184 = vmul.f32 %v1179, %v1182
        %v1185 = vmul.f32 %v1181, %v1183
        %v1186 = vmul.f32 %v1174, %v1184
        %v1187 = vmul.f32 %v1175, %v1185
        %v1188 = vadd.f32 %v1184, 2.0
        %v1189 = vadd.f32 %v1185, 2.0
        %v1190 = vrcp.pop %v1188
        %v1191 = vrcp.pop %v1189
        %v1192 = vmul.f32 %v1186, %v1190
        %v1193 = vmul.f32 %v1187, %v1191
        %1194 = vst [vmem:[%s504] sm:$0xff] %v1192
        %1195 = vst [vmem:[%s504 + $0x8] sm:$0xff] %v1193
        %s1196 = sand.u32 %s358, 1
        %s1197 = scalar_lea.sflag [#allocation4], %s1196
        %s1198 = sand.u32 %s358, 1
        %s1199 = smul.addr %s1198, 16
        %s1200 = scalar_lea.vmem [#allocation5], %s1199
        // Predicated region
        $region85: #{tpu_custom_call.1} parent=79 // pred_check
          %p1201 = pneg %p368
        $region86: #{tpu_custom_call.1} parent=79 // pred_check_branch
          %1203 = sbr.rel (%p1201) target = $region88
        $region87: #{tpu_custom_call.1} parent=79 // pred_region
          %1205 = vsyncadd %s1197, 0
          %s1206 = smul.addr %s30, 2
          %s1207 = smul.addr %s1206, 8
          %s1208 = scalar_lea.hbm %s15, %s1207
          %s1210 = sshll.u32 %s1200, 4
          %s1211 = int_to_ptr.vmem [resolvable:$true] %s1210
          %s1212 = sshll.u32 %s1208, 4
          %s1213 = int_to_ptr.hbm [resolvable:$true] %s1212
          %1215 = dma.vmem_to_hbm [thread:$0]  %s1211, 256, %s1213, %s1197
        $region88: #{tpu_custom_call.1} parent=79 // pred_fallthru
          _
      $region80: #{tpu_custom_call.1} parent=5 // pred_fallthru
        _
      %p1216 = scmp.le.s32.totalorder 2, %s25
      // Predicated region
      $region89: #{tpu_custom_call.1} parent=5 // pred_check
        %p1217 = pneg %p1216
      $region90: #{tpu_custom_call.1} parent=5 // pred_check_branch
        %1219 = sbr.rel (%p1217) target = $region92
      $region91: #{tpu_custom_call.1} parent=5 // pred_region
        %s1220 = ssub.s32 %s25, 2
        // Predicated region
        $region93: #{tpu_custom_call.1} parent=91 // pred_check
          %p1221 = pneg %p374
        $region94: #{tpu_custom_call.1} parent=91 // pred_check_branch
          %1223 = sbr.rel (%p1221) target = $region96
        $region95: #{tpu_custom_call.1} parent=91 // pred_region
          %s1224 = sand.u32 %s359, 1
          %s1225 = scalar_lea.sflag [#allocation4], %s1224
          %s1226 = sand.u32 %s359, 1
          %s1227 = smul.addr %s1226, 16
          %s1228 = scalar_lea.vmem [#allocation5], %s1227
          %1230 = dma.done %s1225, 256
        $region96: #{tpu_custom_call.1} parent=91 // pred_fallthru
          _
      $region92: #{tpu_custom_call.1} parent=5 // pred_fallthru
        _
    $region6: #{tpu_custom_call.1} parent=1 // loop_footer
      %s29 = sadd.s32 1, %s25
    $region7: #{tpu_custom_call.1} parent=1 // loop_footer_branch
      %24 = sbr.rel target = $region3
    $region8: #{tpu_custom_call.1} parent=1 // loop_exit
      _
    %1231 = vsyncpa [#allocation3], 1
    %s1232 = scalar_lea.sflag [#allocation3], 1
    %1233 = vsyncpa %s1232, 1
    %1234 = vsyncpa [#allocation4], 1
    %s1235 = scalar_lea.sflag [#allocation4], 1
    %1236 = vsyncpa %s1235, 1

</llo_original>
